<compile_context>
chip_gen: v7x
topology: tpu7x:2x2x1
jax: 0.10.0
libtpu: 0.0.40
codegen_flags: <defaults>
</compile_context>

<pallas_src>
import jax
import jax.numpy as jnp
from jax.experimental import pallas as pl
from jax.experimental.pallas import tpu as pltpu


_INPUT_DTYPE = jnp.bfloat16   # HBM transfer dtype; all in-kernel math is f32.


# ----------------------------------------------------------------------------
# Pallas kernel: fused bilinear resize + channel softmax + per-class dice sums
# ----------------------------------------------------------------------------
def _pseudo_dice_kernel(x_ref, my_ref, mxt_ref, ts_ref,
                        out_i_ref, out_z_ref, res_ref):
    """Grid = (N, F), F innermost (so the ts DMA is skipped across f).

    x_ref    : (1, 1, C, h_max, w_max) raw zero-padded feat-map logits (bf16)
    my_ref   : (1, H, h_max)           row-resize matrix for feat map f (f32)
    mxt_ref  : (1, w_max, W)           transposed col-resize matrix (f32)
    ts_ref   : (1, C, H, W)            softmax(target) for batch n (bf16)
    out_i_ref: (F, C, 1)  per-(feat map, class) intersection sums (resident)
    out_z_ref: (F, C, 1)  per-(feat map, class) softmax(x) sums    (resident)
    res_ref  : (C, H, W)  f32 scratch holding the resized logits
    """
    n = pl.program_id(0)
    f = pl.program_id(1)

    @pl.when((n == 0) & (f == 0))
    def _():
        out_i_ref[...] = jnp.zeros_like(out_i_ref)
        out_z_ref[...] = jnp.zeros_like(out_z_ref)

    my = my_ref[0].astype(jnp.float32)       # (H, h_max)
    mxt = mxt_ref[0].astype(jnp.float32)     # (w_max, W)
    ts = ts_ref[0].astype(jnp.float32)       # (C, H, W)

    n_cls = res_ref.shape[0]

    # Fused bilinear resize: two small MXU matmuls per channel (static loop,
    # C is tiny).  Padded source rows/cols carry zero weights, so this is
    # exact regardless of the common-size padding.
    for c in range(n_cls):
        xc = x_ref[0, 0, c].astype(jnp.float32)                        # (h, w)
        t1 = jnp.dot(my, xc, preferred_element_type=jnp.float32)       # (H, w)
        res_ref[c] = jnp.dot(t1, mxt, preferred_element_type=jnp.float32)

    x = res_ref[...]                          # (C, H, W) resized logits, f32

    # Channel softmax: the channel axis is the leading (non-layout) dim, so
    # max/sum over it are pure VPU ops (no XLU).  One approx reciprocal (EUP
    # slot) + broadcast multiply replaces C full-width divides.
    xm = jnp.max(x, axis=0, keepdims=True)
    xe = jnp.exp(x - xm)
    inv = pl.reciprocal(jnp.sum(xe, axis=0, keepdims=True), approx=True)
    xs = xe * inv

    prod = xs * ts

    # Per-class spatial sums for this (n, f); accumulated over n into the
    # VMEM-resident per-feat-map outputs (written back to HBM once, at grid
    # end).  The cross-lane reduce happens once per grid step only.
    isum = jnp.sum(jnp.sum(prod, axis=2), axis=1, keepdims=True)       # (C, 1)
    zsum = jnp.sum(jnp.sum(xs, axis=2), axis=1, keepdims=True)         # (C, 1)
    out_i_ref[f] = out_i_ref[f] + isum
    out_z_ref[f] = out_z_ref[f] + zsum


def pseudo_dice_partial_sums(x_raw, my_all, mxt_all, ts):
    """x_raw: (F, N, C, h_max, w_max) bf16; my_all: (F, H, h_max) f32;
    mxt_all: (F, w_max, W) f32; ts: (N, C, H, W) bf16.
    Returns (intersection, z_sum), each (F, C, 1) f32."""
    n_feat, n_batch, n_cls, h_max, w_max = x_raw.shape
    out_h = my_all.shape[1]
    out_w = mxt_all.shape[2]

    in_item = jnp.dtype(x_raw.dtype).itemsize
    x_blk = n_cls * h_max * w_max * in_item
    ts_blk = n_cls * out_h * out_w * jnp.dtype(ts.dtype).itemsize
    m_blk = (out_h * h_max + w_max * out_w) * 4
    # f32 temporaries: softmax chain (x, xe, xs, prod, ...) + matmul interm.
    tmp = (8 * n_cls * out_h * out_w + 2 * n_cls * out_h * w_max) * 4
    est = 2 * (x_blk + ts_blk + m_blk) + tmp + 2 * n_feat * n_cls * 4
    # 48 MiB clamp leaves headroom for Mosaic internal scratch / pipeline
    # buffers on v7x (64 MiB physical VMEM); v5e/v6e have plenty of slack.
    vmem_limit = int(min(max(4 * est, 16 * 1024 * 1024), 48 * 1024 * 1024))

    out_i, out_z = pl.pallas_call(
        _pseudo_dice_kernel,
        out_shape=(jax.ShapeDtypeStruct((n_feat, n_cls, 1), jnp.float32),
                   jax.ShapeDtypeStruct((n_feat, n_cls, 1), jnp.float32)),
        grid_spec=pltpu.PrefetchScalarGridSpec(
            num_scalar_prefetch=0,
            grid=(n_batch, n_feat),   # F innermost: ts block index constant
            in_specs=[
                pl.BlockSpec((1, 1, n_cls, h_max, w_max),
                             lambda n, f: (f, n, 0, 0, 0)),
                pl.BlockSpec((1, out_h, h_max), lambda n, f: (f, 0, 0)),
                pl.BlockSpec((1, w_max, out_w), lambda n, f: (f, 0, 0)),
                pl.BlockSpec((1, n_cls, out_h, out_w),
                             lambda n, f: (n, 0, 0, 0)),
            ],
            out_specs=(
                pl.BlockSpec((n_feat, n_cls, 1), lambda n, f: (0, 0, 0)),
                pl.BlockSpec((n_feat, n_cls, 1), lambda n, f: (0, 0, 0)),
            ),
            scratch_shapes=[pltpu.VMEM((n_cls, out_h, out_w), jnp.float32)],
        ),
        compiler_params=pltpu.CompilerParams(
            # both axes reduce into the VMEM-resident output blocks
            dimension_semantics=("arbitrary", "arbitrary"),
            vmem_limit_bytes=vmem_limit,
        ),
    )(x_raw, my_all, mxt_all, ts)
    return out_i, out_z


# ----------------------------------------------------------------------------
# Glue: bilinear interpolation matrices (PyTorch align_corners=False)
# ----------------------------------------------------------------------------
def _bilinear_matrix(out_size, in_size, dtype=jnp.float32):
    """M (out_size, in_size) s.t. y = M @ x matches torch interpolate
    (mode='bilinear', align_corners=False) along one axis."""
    scale = in_size / out_size
    coords = (jnp.arange(out_size, dtype=jnp.float32) + 0.5) * scale - 0.5
    coords = jnp.clip(coords, 0.0, in_size - 1)
    lo = jnp.floor(coords).astype(jnp.int32)
    hi = jnp.minimum(lo + 1, in_size - 1)
    w_hi = coords - lo.astype(jnp.float32)
    w_lo = 1.0 - w_hi
    rows = jnp.arange(out_size)
    m = jnp.zeros((out_size, in_size), dtype=dtype)
    m = m.at[rows, lo].add(w_lo.astype(dtype))
    m = m.at[rows, hi].add(w_hi.astype(dtype))
    return m


def _pad_cols(m, total_cols):
    cols = m.shape[1]
    if cols == total_cols:
        return m
    return jnp.pad(m, ((0, 0), (0, total_cols - cols)))


# ----------------------------------------------------------------------------
# PseudoSoftLoss forward
# ----------------------------------------------------------------------------
def pseudo_soft_loss(feat_maps, predicts, resize=(16, 16)):
    """feat_maps: list of (N, C, h_i, w_i); predicts: (N, C, H, W) with
    (H, W) == resize.  Returns the scalar pseudo soft dice loss."""
    n, c, h, w = predicts.shape
    assert (h, w) == tuple(resize)
    for fm in feat_maps:
        assert fm.shape[0] == n and fm.shape[1] == c

    # target softmax + per-class sums hoisted out of the kernel (identical for
    # every feat map) -- computed once in f32, shipped to the kernel in bf16.
    target = jax.lax.stop_gradient(predicts.astype(jnp.float32))
    ts = jax.nn.softmax(target, axis=1)                      # (N, C, H, W) f32
    y_sum = jnp.sum(ts, axis=(0, 2, 3))                      # (C,)

    h_max = max(fm.shape[2] for fm in feat_maps)
    w_max = max(fm.shape[3] for fm in feat_maps)

    # Raw (unresized) feat maps zero-padded to a common source size; the
    # per-feat-map resize matrices carry zero weights on the padded rows/cols,
    # so the in-kernel My @ x @ Mx^T resize is exact.
    x_raw = jnp.stack(
        [jnp.pad(fm.astype(jnp.float32),
                 ((0, 0), (0, 0),
                  (0, h_max - fm.shape[2]), (0, w_max - fm.shape[3])))
         for fm in feat_maps], axis=0).astype(_INPUT_DTYPE)  # (F, N, C, hm, wm)

    my_all = jnp.stack(
        [_pad_cols(_bilinear_matrix(h, fm.shape[2]), h_max) for fm in feat_maps],
        axis=0)                                              # (F, H, h_max) f32
    mxt_all = jnp.stack(
        [_pad_cols(_bilinear_matrix(w, fm.shape[3]), w_max).T for fm in feat_maps],
        axis=0)                                              # (F, w_max, W) f32

    out_i, out_z = pseudo_dice_partial_sums(
        x_raw, my_all, mxt_all, ts.astype(_INPUT_DTYPE))

    # finish the dice formula + means in plain JAX (tiny)
    smooth = jnp.float32(1e-05)
    isum = out_i[..., 0]                                     # (F, C)
    zsum = out_z[..., 0]                                     # (F, C)
    dice = 1.0 - (2.0 * isum + smooth) / (zsum + y_sum[None, :] + smooth)
    # mean over classes per feat map, then mean over feat maps == global mean
    return jnp.mean(dice)


# ----------------------------------------------------------------------------
# Pure-JAX reference (mirrors the PyTorch code) for a sanity check
# ----------------------------------------------------------------------------
def _bilinear_resize_nchw(x, out_hw):
    _, _, hh, ww = x.shape
    out_h, out_w = out_hw
    my = _bilinear_matrix(out_h, hh)
    mx = _bilinear_matrix(out_w, ww)
    return jnp.einsum("Hh,nchw,Ww->ncHW", my, x.astype(jnp.float32), mx)


def _ref_softmax_dice(x, t):
    xs = jax.nn.softmax(x, axis=1)
    ts = jax.nn.softmax(t, axis=1)
    smooth = 1e-05
    n = x.shape[1]
    dice = 0.0
    for i in range(n):
        inter = jnp.sum(xs[:, i] * ts[:, i])
        dice += 1.0 - (2 * inter + smooth) / (jnp.sum(xs[:, i]) + jnp.sum(ts[:, i]) + smooth)
    return dice / n


def _ref_pseudo_soft_loss(feat_maps, predicts, resize):
    t = predicts.astype(jnp.float32)
    loss = 0.0
    for fm in feat_maps:
        loss += _ref_softmax_dice(_bilinear_resize_nchw(fm, resize), t)
    return loss / len(feat_maps)


if __name__ == "__main__":
    key = jax.random.PRNGKey(0)
    k1, k2, k3 = jax.random.split(key, 3)

    N, C, H, W = 2, 4, 16, 16
    predicts = jax.random.normal(k1, (N, C, H, W), dtype=jnp.float32)
    feat_maps = [
        jax.random.normal(k2, (N, C, 8, 8), dtype=jnp.float32),    # upsample 8x8 -> 16x16
        jax.random.normal(k3, (N, C, 16, 16), dtype=jnp.float32),  # identity-size resize
    ]

    out = jax.block_until_ready(pseudo_soft_loss(feat_maps, predicts, resize=(H, W)))
    ref = jax.block_until_ready(_ref_pseudo_soft_loss(feat_maps, predicts, (H, W)))

    # tolerance covers the bf16 input quantization (perf-review item) plus the
    # hardware approximate reciprocal used inside the softmax.
    assert jnp.abs(out - ref) < 3e-3, (out, ref)

    print("KERNEL_OK")
</pallas_src>

<mosaic_0001>
module attributes {stable_mosaic.version = 11 : i64} {
  func.func @_pseudo_dice_kernel(%arg0: i32, %arg1: i32, %arg2: memref<1x1x4x16x16xbf16, #tpu.memory_space<vmem>>, %arg3: memref<1x16x16xf32, #tpu.memory_space<vmem>>, %arg4: memref<1x16x16xf32, #tpu.memory_space<vmem>>, %arg5: memref<1x4x16x16xbf16, #tpu.memory_space<vmem>>, %arg6: memref<2x4x1xf32, #tpu.memory_space<vmem>>, %arg7: memref<2x4x1xf32, #tpu.memory_space<vmem>>, %arg8: memref<4x16x16xf32, #tpu.memory_space<vmem>>) attributes {dimension_semantics = [#tpu.dimension_semantics<arbitrary>, #tpu.dimension_semantics<arbitrary>], iteration_bounds = array<i64: 2, 2>, scalar_prefetch = 0 : i64, scratch_operands = 1 : i64, tpu.core_type = #tpu.core_type<tc>, window_params = [{transform_indices = @transform_0, window_bounds = array<i64: 1, 1, 4, 16, 16>}, {transform_indices = @transform_1, window_bounds = array<i64: 1, 16, 16>}, {transform_indices = @transform_2, window_bounds = array<i64: 1, 16, 16>}, {transform_indices = @transform_3, window_bounds = array<i64: 1, 4, 16, 16>}, {pipeline_mode = #tpu.pipeline_mode<synchronous>, transform_indices = @transform_4, window_bounds = array<i64: 2, 4, 1>}, {pipeline_mode = #tpu.pipeline_mode<synchronous>, transform_indices = @transform_5, window_bounds = array<i64: 2, 4, 1>}]} {
    %c0_i32 = arith.constant 0 : i32
    %0 = arith.cmpi eq, %arg0, %c0_i32 : i32
    %c0_i32_0 = arith.constant 0 : i32
    %1 = arith.cmpi eq, %arg1, %c0_i32_0 : i32
    %2 = arith.andi %0, %1 : i1
    %3 = arith.extui %2 : i1 to i32
    %c0_i32_1 = arith.constant 0 : i32
    %4 = arith.cmpi ne, %3, %c0_i32_1 : i32
    scf.if %4 {
      %cst_64 = arith.constant 0.000000e+00 : f32
      %78 = vector.broadcast %cst_64 : f32 to vector<2x4x1xf32>
      %c0_65 = arith.constant 0 : index
      %c0_66 = arith.constant 0 : index
      %c0_67 = arith.constant 0 : index
      %79 = vector.load %arg6[%c0_65, %c0_66, %c0_67] : memref<2x4x1xf32, #tpu.memory_space<vmem>>, vector<2x4x1xf32>
      tpu.vector_store %arg6[%c0_65, %c0_66, %c0_67], %78 {strides = array<i32>} : memref<2x4x1xf32, #tpu.memory_space<vmem>>, vector<2x4x1xf32>,
      %cst_68 = arith.constant 0.000000e+00 : f32
      %80 = vector.broadcast %cst_68 : f32 to vector<2x4x1xf32>
      %c0_69 = arith.constant 0 : index
      %c0_70 = arith.constant 0 : index
      %c0_71 = arith.constant 0 : index
      %81 = vector.load %arg7[%c0_69, %c0_70, %c0_71] : memref<2x4x1xf32, #tpu.memory_space<vmem>>, vector<2x4x1xf32>
      tpu.vector_store %arg7[%c0_69, %c0_70, %c0_71], %80 {strides = array<i32>} : memref<2x4x1xf32, #tpu.memory_space<vmem>>, vector<2x4x1xf32>,
    } else {
    }
    %c0 = arith.constant 0 : index
    %c0_2 = arith.constant 0 : index
    %c0_3 = arith.constant 0 : index
    %5 = vector.load %arg3[%c0, %c0_2, %c0_3] : memref<1x16x16xf32, #tpu.memory_space<vmem>>, vector<1x16x16xf32>
    %6 = vector.shape_cast %5 : vector<1x16x16xf32> to vector<16x16xf32>
    %c0_4 = arith.constant 0 : index
    %c0_5 = arith.constant 0 : index
    %c0_6 = arith.constant 0 : index
    %7 = vector.load %arg4[%c0_4, %c0_5, %c0_6] : memref<1x16x16xf32, #tpu.memory_space<vmem>>, vector<1x16x16xf32>
    %8 = vector.shape_cast %7 : vector<1x16x16xf32> to vector<16x16xf32>
    %c0_7 = arith.constant 0 : index
    %c0_8 = arith.constant 0 : index
    %c0_9 = arith.constant 0 : index
    %c0_10 = arith.constant 0 : index
    %9 = vector.load %arg5[%c0_7, %c0_8, %c0_9, %c0_10] : memref<1x4x16x16xbf16, #tpu.memory_space<vmem>>, vector<1x4x16x16xbf16>
    %10 = vector.shape_cast %9 : vector<1x4x16x16xbf16> to vector<4x16x16xbf16>
    %11 = arith.extf %10 : vector<4x16x16xbf16> to vector<4x16x16xf32>
    %c0_11 = arith.constant 0 : index
    %c0_12 = arith.constant 0 : index
    %c0_13 = arith.constant 0 : index
    %c0_14 = arith.constant 0 : index
    %c0_15 = arith.constant 0 : index
    %12 = vector.load %arg2[%c0_11, %c0_12, %c0_13, %c0_14, %c0_15] : memref<1x1x4x16x16xbf16, #tpu.memory_space<vmem>>, vector<1x1x1x16x16xbf16>
    %13 = vector.shape_cast %12 : vector<1x1x1x16x16xbf16> to vector<16x16xbf16>
    %14 = arith.extf %13 : vector<16x16xbf16> to vector<16x16xf32>
    %cst = arith.constant dense<0.000000e+00> : vector<16x16xf32>
    %15 = tpu.matmul %6, %14, %cst {dimension_numbers = #tpu.dot_dimension_numbers<[1], [0], [0], [1], [0, 0, 1, 1], [], []>} : vector<16x16xf32>, vector<16x16xf32>, vector<16x16xf32> -> vector<16x16xf32>
    %cst_16 = arith.constant dense<0.000000e+00> : vector<16x16xf32>
    %16 = tpu.matmul %15, %8, %cst_16 {dimension_numbers = #tpu.dot_dimension_numbers<[1], [0], [0], [1], [0, 0, 1, 1], [], []>} : vector<16x16xf32>, vector<16x16xf32>, vector<16x16xf32> -> vector<16x16xf32>
    %c0_17 = arith.constant 0 : index
    %c0_18 = arith.constant 0 : index
    %c0_19 = arith.constant 0 : index
    %17 = vector.load %arg8[%c0_17, %c0_18, %c0_19] : memref<4x16x16xf32, #tpu.memory_space<vmem>>, vector<1x16x16xf32>
    %18 = vector.shape_cast %17 : vector<1x16x16xf32> to vector<16x16xf32>
    %19 = vector.shape_cast %16 : vector<16x16xf32> to vector<1x16x16xf32>
    tpu.vector_store %arg8[%c0_17, %c0_18, %c0_19], %19 {strides = array<i32>} : memref<4x16x16xf32, #tpu.memory_space<vmem>>, vector<1x16x16xf32>,
    %c0_20 = arith.constant 0 : index
    %c0_21 = arith.constant 0 : index
    %c1 = arith.constant 1 : index
    %c0_22 = arith.constant 0 : index
    %c0_23 = arith.constant 0 : index
    %20 = vector.load %arg2[%c0_20, %c0_21, %c1, %c0_22, %c0_23] : memref<1x1x4x16x16xbf16, #tpu.memory_space<vmem>>, vector<1x1x1x16x16xbf16>
    %21 = vector.shape_cast %20 : vector<1x1x1x16x16xbf16> to vector<16x16xbf16>
    %22 = arith.extf %21 : vector<16x16xbf16> to vector<16x16xf32>
    %cst_24 = arith.constant dense<0.000000e+00> : vector<16x16xf32>
    %23 = tpu.matmul %6, %22, %cst_24 {dimension_numbers = #tpu.dot_dimension_numbers<[1], [0], [0], [1], [0, 0, 1, 1], [], []>} : vector<16x16xf32>, vector<16x16xf32>, vector<16x16xf32> -> vector<16x16xf32>
    %cst_25 = arith.constant dense<0.000000e+00> : vector<16x16xf32>
    %24 = tpu.matmul %23, %8, %cst_25 {dimension_numbers = #tpu.dot_dimension_numbers<[1], [0], [0], [1], [0, 0, 1, 1], [], []>} : vector<16x16xf32>, vector<16x16xf32>, vector<16x16xf32> -> vector<16x16xf32>
    %c1_26 = arith.constant 1 : index
    %c0_27 = arith.constant 0 : index
    %c0_28 = arith.constant 0 : index
    %25 = vector.load %arg8[%c1_26, %c0_27, %c0_28] : memref<4x16x16xf32, #tpu.memory_space<vmem>>, vector<1x16x16xf32>
    %26 = vector.shape_cast %25 : vector<1x16x16xf32> to vector<16x16xf32>
    %27 = vector.shape_cast %24 : vector<16x16xf32> to vector<1x16x16xf32>
    tpu.vector_store %arg8[%c1_26, %c0_27, %c0_28], %27 {strides = array<i32>} : memref<4x16x16xf32, #tpu.memory_space<vmem>>, vector<1x16x16xf32>,
    %c0_29 = arith.constant 0 : index
    %c0_30 = arith.constant 0 : index
    %c2 = arith.constant 2 : index
    %c0_31 = arith.constant 0 : index
    %c0_32 = arith.constant 0 : index
    %28 = vector.load %arg2[%c0_29, %c0_30, %c2, %c0_31, %c0_32] : memref<1x1x4x16x16xbf16, #tpu.memory_space<vmem>>, vector<1x1x1x16x16xbf16>
    %29 = vector.shape_cast %28 : vector<1x1x1x16x16xbf16> to vector<16x16xbf16>
    %30 = arith.extf %29 : vector<16x16xbf16> to vector<16x16xf32>
    %cst_33 = arith.constant dense<0.000000e+00> : vector<16x16xf32>
    %31 = tpu.matmul %6, %30, %cst_33 {dimension_numbers = #tpu.dot_dimension_numbers<[1], [0], [0], [1], [0, 0, 1, 1], [], []>} : vector<16x16xf32>, vector<16x16xf32>, vector<16x16xf32> -> vector<16x16xf32>
    %cst_34 = arith.constant dense<0.000000e+00> : vector<16x16xf32>
    %32 = tpu.matmul %31, %8, %cst_34 {dimension_numbers = #tpu.dot_dimension_numbers<[1], [0], [0], [1], [0, 0, 1, 1], [], []>} : vector<16x16xf32>, vector<16x16xf32>, vector<16x16xf32> -> vector<16x16xf32>
    %c2_35 = arith.constant 2 : index
    %c0_36 = arith.constant 0 : index
    %c0_37 = arith.constant 0 : index
    %33 = vector.load %arg8[%c2_35, %c0_36, %c0_37] : memref<4x16x16xf32, #tpu.memory_space<vmem>>, vector<1x16x16xf32>
    %34 = vector.shape_cast %33 : vector<1x16x16xf32> to vector<16x16xf32>
    %35 = vector.shape_cast %32 : vector<16x16xf32> to vector<1x16x16xf32>
    tpu.vector_store %arg8[%c2_35, %c0_36, %c0_37], %35 {strides = array<i32>} : memref<4x16x16xf32, #tpu.memory_space<vmem>>, vector<1x16x16xf32>,
    %c0_38 = arith.constant 0 : index
    %c0_39 = arith.constant 0 : index
    %c3 = arith.constant 3 : index
    %c0_40 = arith.constant 0 : index
    %c0_41 = arith.constant 0 : index
    %36 = vector.load %arg2[%c0_38, %c0_39, %c3, %c0_40, %c0_41] : memref<1x1x4x16x16xbf16, #tpu.memory_space<vmem>>, vector<1x1x1x16x16xbf16>
    %37 = vector.shape_cast %36 : vector<1x1x1x16x16xbf16> to vector<16x16xbf16>
    %38 = arith.extf %37 : vector<16x16xbf16> to vector<16x16xf32>
    %cst_42 = arith.constant dense<0.000000e+00> : vector<16x16xf32>
    %39 = tpu.matmul %6, %38, %cst_42 {dimension_numbers = #tpu.dot_dimension_numbers<[1], [0], [0], [1], [0, 0, 1, 1], [], []>} : vector<16x16xf32>, vector<16x16xf32>, vector<16x16xf32> -> vector<16x16xf32>
    %cst_43 = arith.constant dense<0.000000e+00> : vector<16x16xf32>
    %40 = tpu.matmul %39, %8, %cst_43 {dimension_numbers = #tpu.dot_dimension_numbers<[1], [0], [0], [1], [0, 0, 1, 1], [], []>} : vector<16x16xf32>, vector<16x16xf32>, vector<16x16xf32> -> vector<16x16xf32>
    %c3_44 = arith.constant 3 : index
    %c0_45 = arith.constant 0 : index
    %c0_46 = arith.constant 0 : index
    %41 = vector.load %arg8[%c3_44, %c0_45, %c0_46] : memref<4x16x16xf32, #tpu.memory_space<vmem>>, vector<1x16x16xf32>
    %42 = vector.shape_cast %41 : vector<1x16x16xf32> to vector<16x16xf32>
    %43 = vector.shape_cast %40 : vector<16x16xf32> to vector<1x16x16xf32>
    tpu.vector_store %arg8[%c3_44, %c0_45, %c0_46], %43 {strides = array<i32>} : memref<4x16x16xf32, #tpu.memory_space<vmem>>, vector<1x16x16xf32>,
    %c0_47 = arith.constant 0 : index
    %c0_48 = arith.constant 0 : index
    %c0_49 = arith.constant 0 : index
    %44 = vector.load %arg8[%c0_47, %c0_48, %c0_49] : memref<4x16x16xf32, #tpu.memory_space<vmem>>, vector<4x16x16xf32>
    %cst_50 = arith.constant dense<0xFF800000> : vector<16x16xf32>
    %45 = vector.multi_reduction <maximumf>, %44, %cst_50 [0] : vector<4x16x16xf32> to vector<16x16xf32>
    %46 = vector.shape_cast %45 : vector<16x16xf32> to vector<1x16x16xf32>
    %47 = vector.broadcast %46 : vector<1x16x16xf32> to vector<4x16x16xf32>
    %48 = arith.subf %44, %47 : vector<4x16x16xf32>
    %49 = math.exp %48 : vector<4x16x16xf32>
    %cst_51 = arith.constant dense<0.000000e+00> : vector<16x16xf32>
    %50 = vector.multi_reduction <add>, %49, %cst_51 [0] : vector<4x16x16xf32> to vector<16x16xf32>
    %51 = vector.shape_cast %50 : vector<16x16xf32> to vector<1x16x16xf32>
    %52 = tpu.reciprocal %51 {approx = true} : vector<1x16x16xf32> -> vector<1x16x16xf32>
    %53 = vector.broadcast %52 : vector<1x16x16xf32> to vector<4x16x16xf32>
    %54 = arith.mulf %49, %53 : vector<4x16x16xf32>
    %55 = arith.mulf %54, %11 : vector<4x16x16xf32>
    %cst_52 = arith.constant dense<0.000000e+00> : vector<4x16xf32>
    %56 = vector.multi_reduction <add>, %55, %cst_52 [2] : vector<4x16x16xf32> to vector<4x16xf32>
    %cst_53 = arith.constant dense<0.000000e+00> : vector<4xf32>
    %57 = vector.multi_reduction <add>, %56, %cst_53 [1] : vector<4x16xf32> to vector<4xf32>
    %58 = vector.shape_cast %57 : vector<4xf32> to vector<4x1xf32>
    %cst_54 = arith.constant dense<0.000000e+00> : vector<4x16xf32>
    %59 = vector.multi_reduction <add>, %54, %cst_54 [2] : vector<4x16x16xf32> to vector<4x16xf32>
    %cst_55 = arith.constant dense<0.000000e+00> : vector<4xf32>
    %60 = vector.multi_reduction <add>, %59, %cst_55 [1] : vector<4x16xf32> to vector<4xf32>
    %61 = vector.shape_cast %60 : vector<4xf32> to vector<4x1xf32>
    %62 = arith.index_cast %arg1 : i32 to index
    %c0_56 = arith.constant 0 : index
    %c0_57 = arith.constant 0 : index
    %63 = vector.load %arg6[%62, %c0_56, %c0_57] : memref<2x4x1xf32, #tpu.memory_space<vmem>>, vector<1x4x1xf32>
    %64 = vector.shape_cast %63 : vector<1x4x1xf32> to vector<4x1xf32>
    %65 = arith.addf %64, %58 : vector<4x1xf32>
    %66 = arith.index_cast %arg1 : i32 to index
    %c0_58 = arith.constant 0 : index
    %c0_59 = arith.constant 0 : index
    %67 = vector.load %arg6[%66, %c0_58, %c0_59] : memref<2x4x1xf32, #tpu.memory_space<vmem>>, vector<1x4x1xf32>
    %68 = vector.shape_cast %67 : vector<1x4x1xf32> to vector<4x1xf32>
    %69 = vector.shape_cast %65 : vector<4x1xf32> to vector<1x4x1xf32>
    tpu.vector_store %arg6[%66, %c0_58, %c0_59], %69 {strides = array<i32>} : memref<2x4x1xf32, #tpu.memory_space<vmem>>, vector<1x4x1xf32>,
    %70 = arith.index_cast %arg1 : i32 to index
    %c0_60 = arith.constant 0 : index
    %c0_61 = arith.constant 0 : index
    %71 = vector.load %arg7[%70, %c0_60, %c0_61] : memref<2x4x1xf32, #tpu.memory_space<vmem>>, vector<1x4x1xf32>
    %72 = vector.shape_cast %71 : vector<1x4x1xf32> to vector<4x1xf32>
    %73 = arith.addf %72, %61 : vector<4x1xf32>
    %74 = arith.index_cast %arg1 : i32 to index
    %c0_62 = arith.constant 0 : index
    %c0_63 = arith.constant 0 : index
    %75 = vector.load %arg7[%74, %c0_62, %c0_63] : memref<2x4x1xf32, #tpu.memory_space<vmem>>, vector<1x4x1xf32>
    %76 = vector.shape_cast %75 : vector<1x4x1xf32> to vector<4x1xf32>
    %77 = vector.shape_cast %73 : vector<4x1xf32> to vector<1x4x1xf32>
    tpu.vector_store %arg7[%74, %c0_62, %c0_63], %77 {strides = array<i32>} : memref<2x4x1xf32, #tpu.memory_space<vmem>>, vector<1x4x1xf32>,
    return
  }
  func.func @transform_0(%arg0: i32, %arg1: i32) -> (i32, i32, i32, i32, i32) {
    %c0_i32 = arith.constant 0 : i32
    %c0_i32_0 = arith.constant 0 : i32
    %c0_i32_1 = arith.constant 0 : i32
    %c0_i32_2 = arith.constant 0 : i32
    return %arg1, %arg0, %c0_i32, %c0_i32_0, %c0_i32_1 : i32, i32, i32, i32, i32
  }
  func.func @transform_1(%arg0: i32, %arg1: i32) -> (i32, i32, i32) {
    %c0_i32 = arith.constant 0 : i32
    %c0_i32_0 = arith.constant 0 : i32
    %c0_i32_1 = arith.constant 0 : i32
    return %arg1, %c0_i32, %c0_i32_0 : i32, i32, i32
  }
  func.func @transform_2(%arg0: i32, %arg1: i32) -> (i32, i32, i32) {
    %c0_i32 = arith.constant 0 : i32
    %c0_i32_0 = arith.constant 0 : i32
    %c0_i32_1 = arith.constant 0 : i32
    return %arg1, %c0_i32, %c0_i32_0 : i32, i32, i32
  }
  func.func @transform_3(%arg0: i32, %arg1: i32) -> (i32, i32, i32, i32) {
    %c0_i32 = arith.constant 0 : i32
    %c0_i32_0 = arith.constant 0 : i32
    %c0_i32_1 = arith.constant 0 : i32
    %c0_i32_2 = arith.constant 0 : i32
    return %arg0, %c0_i32, %c0_i32_0, %c0_i32_1 : i32, i32, i32, i32
  }
  func.func @transform_4(%arg0: i32, %arg1: i32) -> (i32, i32, i32) {
    %c0_i32 = arith.constant 0 : i32
    %c0_i32_0 = arith.constant 0 : i32
    %c0_i32_1 = arith.constant 0 : i32
    %c0_i32_2 = arith.constant 0 : i32
    return %c0_i32, %c0_i32_0, %c0_i32_1 : i32, i32, i32
  }
  func.func @transform_5(%arg0: i32, %arg1: i32) -> (i32, i32, i32) {
    %c0_i32 = arith.constant 0 : i32
    %c0_i32_0 = arith.constant 0 : i32
    %c0_i32_1 = arith.constant 0 : i32
    %c0_i32_2 = arith.constant 0 : i32
    return %c0_i32, %c0_i32_0, %c0_i32_1 : i32, i32, i32
  }
}

</mosaic_0001>

<llo_original>
// kernel: tpu_custom_call.1
$region0: #{tpu_custom_call.1}
  #allocation0 [shape = 'u32[]', space=smem, size = 0x4, offset = 0x4, fixed_abs, tag = 'smem constant byte address 0x4 - core index']
  #allocation1 [shape = 'u32[144,128]{1,0:T(1,128)}', space=vmem, size = 0x12000, scoped, tag = 'internal scratch']
  #allocation2 [shape = 'f32[4,16,16]{2,1,0:T(8,128)}', space=vmem, size = 0x8000, scoped, tag = 'scratch operand']
  %s0 = inlined_call_operand.hbm [shape: bf16[2,2,4,16,16], index: 0, kind: input, shape index: {}]
  %s1 = inlined_call_operand.hbm [shape: f32[2,16,16], index: 1, kind: input, shape index: {}]
  %s2 = inlined_call_operand.hbm [shape: f32[2,16,16], index: 2, kind: input, shape index: {}]
  %s3 = inlined_call_operand.hbm [shape: bf16[2,4,16,16], index: 3, kind: input, shape index: {}]
  %s4 = inlined_call_operand.vmem [shape: f32[2,4,1], index: 4, kind: output, shape index: {0}]
  %s5 = inlined_call_operand.vmem [shape: f32[2,4,1], index: 5, kind: output, shape index: {1}]
  %6 = xla_tuple %s4, %s5
  %s7 = sld [smem:[#allocation0]]
  $region77: #{tpu_custom_call.1} parent=0
    _
  %s9 = ssub.s32 1, %s7
  %s10 = scalar_select 0, %s9, %s7
  $region1: #{tpu_custom_call.1} parent=0
    #allocation3 [shape = 'u8[32768]{0}', space=vmem, size = 0x8000, scoped, tag = 'input window, operand 0']
    #allocation4 [shape = 's32[2]{0}', space=sflag, size = 0x8, scoped, tag = 'scoped memory for tpu_custom_call.1']
    #allocation5 [shape = 'u8[16384]{0}', space=vmem, size = 0x4000, scoped, tag = 'input window, operand 1']
    #allocation6 [shape = 's32[2]{0}', space=sflag, size = 0x8, scoped, tag = 'scoped memory for tpu_custom_call.1']
    #allocation7 [shape = 'u8[16384]{0}', space=vmem, size = 0x4000, scoped, tag = 'input window, operand 2']
    #allocation8 [shape = 'u8[32768]{0}', space=vmem, size = 0x8000, scoped, tag = 'input window, operand 3']
    #allocation9 [shape = 's32[2]{0}', space=sflag, size = 0x8, scoped, tag = 'scoped memory for tpu_custom_call.1']
    %11 = vsyncpa [#allocation4], 0
    %s12 = scalar_lea.sflag [#allocation4], 1
    %13 = vsyncpa %s12, 0
    %14 = vsyncpa [#allocation6], 0
    %s15 = scalar_lea.sflag [#allocation6], 1
    %16 = vsyncpa %s15, 0
    %17 = vsyncpa [#allocation9], 0
    %s18 = scalar_lea.sflag [#allocation9], 1
    %19 = vsyncpa %s18, 0
    loop: start=0, step=1, limit=6
    $region2: #{tpu_custom_call.1} parent=1 // loop_pre_header
      _
    $region3: #{tpu_custom_call.1} parent=1 // loop_header
      %s21 = sphi 0, %s25
      %p22 = scmp.ge.s32.totalorder %s21, 6
      %s28 = sphi 0, %s40
      %s29 = sphi 0, %s36
      %s30 = sphi 0, %s28
      %s31 = sphi 0, %s29
      %s32 = sphi 0, %s30
      %s33 = sphi 0, %s31
      %s45 = sphi 0, %s47
      %s48 = sphi 0, %s45
      %s49 = sphi 0, %s48
      %s65 = sphi 0, %s49
      %s71 = sphi 0, %s73
      %s74 = sphi 0, %s71
      %s75 = sphi 0, %s74
      %s91 = sphi 0, %s75
      %s97 = sphi 0, %s99
      %s100 = sphi 0, %s97
      %s101 = sphi 0, %s100
      %s117 = sphi 0, %s101
      %s123 = sphi 0, %s125
      %s126 = sphi 0, %s123
      %s127 = sphi 0, %s126
      %s143 = sphi 0, %s127
      %s147 = sphi 0, %s147
      %s149 = sphi 0, %s147
      %s150 = sphi 0, %s149
      %s164 = sphi 0, %s150
      %s168 = sphi 0, %s168
      %s170 = sphi 0, %s168
      %s171 = sphi 0, %s170
      %s185 = sphi 0, %s171
    $region4: #{tpu_custom_call.1} parent=1 // loop_header_branch
      %24 = sbr.rel (%p22) target = $region8
    $region5: #{tpu_custom_call.1} parent=1 // loop_body
      %s26 = ssub.s32 %s21, 1
      %s27 = ssub.s32 %s21, 2
      %s34 = sadd.s32 1, %s29
      %p35 = scmp.ge.s32.totalorder %s34, 2
      %s36 = scalar_select %p35, 0, %s34
      %s37 = sadd.s32 1, %s28
      %s38 = scalar_select %p35, %s37, %s28
      %p39 = scmp.ge.s32.totalorder %s38, 2
      %s40 = scalar_select %p39, 0, %s38
      %s41 = ssub.s32 %s29, %s36
      %s42 = ssub.s32 %s28, %s40
      %s43 = sor.u32 %s41, %s42
      %p44 = scmp.eq.s32.totalorder %s43, 0
      %s46 = sadd.s32 %s45, 1
      %s47 = scalar_select %p44, %s45, %s46
      %p50 = pneg %p44
      %p51 = scmp.eq.s32.totalorder %s21, 3
      %p52 = por %p50, %p51
      %p53 = scmp.ne.s32.totalorder %s45, %s48
      %p54 = scmp.eq.s32.totalorder %s21, 0
      %p55 = por %p53, %p54
      %p56 = scmp.ne.s32.totalorder %s45, %s48
      %p57 = scmp.eq.s32.totalorder %s26, 3
      %p58 = por %p56, %p57
      %p59 = scmp.ne.s32.totalorder %s48, %s49
      %p60 = scmp.eq.s32.totalorder %s26, 0
      %p61 = por %p59, %p60
      %p62 = scmp.ne.s32.totalorder %s48, %s49
      %p63 = scmp.eq.s32.totalorder %s27, 3
      %p64 = por %p62, %p63
      %p66 = scmp.ne.s32.totalorder %s49, %s65
      %p67 = scmp.eq.s32.totalorder %s27, 0
      %p68 = por %p66, %p67
      %s69 = ssub.s32 %s29, %s36
      %p70 = scmp.eq.s32.totalorder %s69, 0
      %s72 = sadd.s32 %s71, 1
      %s73 = scalar_select %p70, %s71, %s72
      %p76 = pneg %p70
      %p77 = scmp.eq.s32.totalorder %s21, 3
      %p78 = por %p76, %p77
      %p79 = scmp.ne.s32.totalorder %s71, %s74
      %p80 = scmp.eq.s32.totalorder %s21, 0
      %p81 = por %p79, %p80
      %p82 = scmp.ne.s32.totalorder %s71, %s74
      %p83 = scmp.eq.s32.totalorder %s26, 3
      %p84 = por %p82, %p83
      %p85 = scmp.ne.s32.totalorder %s74, %s75
      %p86 = scmp.eq.s32.totalorder %s26, 0
      %p87 = por %p85, %p86
      %p88 = scmp.ne.s32.totalorder %s74, %s75
      %p89 = scmp.eq.s32.totalorder %s27, 3
      %p90 = por %p88, %p89
      %p92 = scmp.ne.s32.totalorder %s75, %s91
      %p93 = scmp.eq.s32.totalorder %s27, 0
      %p94 = por %p92, %p93
      %s95 = ssub.s32 %s29, %s36
      %p96 = scmp.eq.s32.totalorder %s95, 0
      %s98 = sadd.s32 %s97, 1
      %s99 = scalar_select %p96, %s97, %s98
      %p102 = pneg %p96
      %p103 = scmp.eq.s32.totalorder %s21, 3
      %p104 = por %p102, %p103
      %p105 = scmp.ne.s32.totalorder %s97, %s100
      %p106 = scmp.eq.s32.totalorder %s21, 0
      %p107 = por %p105, %p106
      %p108 = scmp.ne.s32.totalorder %s97, %s100
      %p109 = scmp.eq.s32.totalorder %s26, 3
      %p110 = por %p108, %p109
      %p111 = scmp.ne.s32.totalorder %s100, %s101
      %p112 = scmp.eq.s32.totalorder %s26, 0
      %p113 = por %p111, %p112
      %p114 = scmp.ne.s32.totalorder %s100, %s101
      %p115 = scmp.eq.s32.totalorder %s27, 3
      %p116 = por %p114, %p115
      %p118 = scmp.ne.s32.totalorder %s101, %s117
      %p119 = scmp.eq.s32.totalorder %s27, 0
      %p120 = por %p118, %p119
      %s121 = ssub.s32 %s28, %s40
      %p122 = scmp.eq.s32.totalorder %s121, 0
      %s124 = sadd.s32 %s123, 1
      %s125 = scalar_select %p122, %s123, %s124
      %p128 = pneg %p122
      %p129 = scmp.eq.s32.totalorder %s21, 3
      %p130 = por %p128, %p129
      %p131 = scmp.ne.s32.totalorder %s123, %s126
      %p132 = scmp.eq.s32.totalorder %s21, 0
      %p133 = por %p131, %p132
      %p134 = scmp.ne.s32.totalorder %s123, %s126
      %p135 = scmp.eq.s32.totalorder %s26, 3
      %p136 = por %p134, %p135
      %p137 = scmp.ne.s32.totalorder %s126, %s127
      %p138 = scmp.eq.s32.totalorder %s26, 0
      %p139 = por %p137, %p138
      %p140 = scmp.ne.s32.totalorder %s126, %s127
      %p141 = scmp.eq.s32.totalorder %s27, 3
      %p142 = por %p140, %p141
      %p144 = scmp.ne.s32.totalorder %s127, %s143
      %p145 = scmp.eq.s32.totalorder %s27, 0
      %p146 = por %p144, %p145
      %s148 = sadd.s32 %s147, 1
      %p151 = scmp.eq.s32.totalorder %s21, 3
      %p152 = scmp.ne.s32.totalorder %s147, %s149
      %p153 = scmp.eq.s32.totalorder %s21, 0
      %p154 = por %p152, %p153
      %p155 = scmp.ne.s32.totalorder %s147, %s149
      %p156 = scmp.eq.s32.totalorder %s26, 3
      %p157 = por %p155, %p156
      %p158 = scmp.ne.s32.totalorder %s149, %s150
      %p159 = scmp.eq.s32.totalorder %s26, 0
      %p160 = por %p158, %p159
      %p161 = scmp.ne.s32.totalorder %s149, %s150
      %p162 = scmp.eq.s32.totalorder %s27, 3
      %p163 = por %p161, %p162
      %p165 = scmp.ne.s32.totalorder %s150, %s164
      %p166 = scmp.eq.s32.totalorder %s27, 0
      %p167 = por %p165, %p166
      %s169 = sadd.s32 %s168, 1
      %p172 = scmp.eq.s32.totalorder %s21, 3
      %p173 = scmp.ne.s32.totalorder %s168, %s170
      %p174 = scmp.eq.s32.totalorder %s21, 0
      %p175 = por %p173, %p174
      %p176 = scmp.ne.s32.totalorder %s168, %s170
      %p177 = scmp.eq.s32.totalorder %s26, 3
      %p178 = por %p176, %p177
      %p179 = scmp.ne.s32.totalorder %s170, %s171
      %p180 = scmp.eq.s32.totalorder %s26, 0
      %p181 = por %p179, %p180
      %p182 = scmp.ne.s32.totalorder %s170, %s171
      %p183 = scmp.eq.s32.totalorder %s27, 3
      %p184 = por %p182, %p183
      %p186 = scmp.ne.s32.totalorder %s171, %s185
      %p187 = scmp.eq.s32.totalorder %s27, 0
      %p188 = por %p186, %p187
      %p189 = scmp.le.s32.totalorder 1, %s21
      %p190 = scmp.lt.s32.totalorder %s21, 5
      %p191 = pnand %p189, %p190
      %p192 = pneg %p191
      // Predicated region
      $region9: #{tpu_custom_call.1} parent=5 // pred_check
        _
      $region10: #{tpu_custom_call.1} parent=5 // pred_check_branch
        %194 = sbr.rel (%p191) target = $region12
      $region11: #{tpu_custom_call.1} parent=5 // pred_region
        %s195 = ssub.s32 %s21, 1
      $region12: #{tpu_custom_call.1} parent=5 // pred_fallthru
        _
      %p196 = scmp.lt.s32.totalorder %s21, 4
      // Predicated region
      $region13: #{tpu_custom_call.1} parent=5 // pred_check
        %p197 = pneg %p196
      $region14: #{tpu_custom_call.1} parent=5 // pred_check_branch
        %199 = sbr.rel (%p197) target = $region16
      $region15: #{tpu_custom_call.1} parent=5 // pred_region
        // Predicated region
        $region17: #{tpu_custom_call.1} parent=15 // pred_check
          %p200 = pneg %p55
        $region18: #{tpu_custom_call.1} parent=15 // pred_check_branch
          %202 = sbr.rel (%p200) target = $region20
        $region19: #{tpu_custom_call.1} parent=15 // pred_region
          %s203 = sand.u32 %s45, 1
          %s204 = scalar_lea.sflag [#allocation4], %s203
          %s205 = sand.u32 %s45, 1
          %s206 = smul.addr %s205, 32
          %s207 = scalar_lea.vmem [#allocation3], %s206
          %s209 = ssub.s32 512, 512
          %210 = vsyncadd %s204, %s209
          %s211 = smul.addr %s28, 8
          %s212 = smul.addr %s29, 16
          %s213 = sadd.s32 %s211, %s212
          %s214 = smul.addr %s213, 64
          %s215 = scalar_lea.hbm %s0, %s214
          %s216 = sshll.u32 %s207, 4
          %s217 = int_to_ptr.vmem [resolvable:$true] %s216
          %222 = dma.hbm_to_vmem [thread:$0]  %s215, 512, %s217, %s204, 64, 64, 4
        $region20: #{tpu_custom_call.1} parent=15 // pred_fallthru
          _
        // Predicated region
        $region21: #{tpu_custom_call.1} parent=15 // pred_check
          %p223 = pneg %p81
        $region22: #{tpu_custom_call.1} parent=15 // pred_check_branch
          %225 = sbr.rel (%p223) target = $region24
        $region23: #{tpu_custom_call.1} parent=15 // pred_region
          %s226 = sand.u32 %s21, 1
          %s227 = scalar_lea.sflag [#allocation6], %s226
          %s228 = sand.u32 %s71, 1
          %s229 = smul.addr %s228, 16
          %s230 = scalar_lea.vmem [#allocation5], %s229
          %s232 = ssub.s32 256, 256
          %233 = vsyncadd %s227, %s232
          %s234 = smul.addr %s29, 2
          %s235 = smul.addr %s234, 128
          %s236 = scalar_lea.hbm %s1, %s235
          %s237 = sshll.u32 %s230, 4
          %s238 = int_to_ptr.vmem [resolvable:$true] %s237
          %243 = dma.hbm_to_vmem [thread:$0]  %s236, 256, %s238, %s227, 128, 128, 8
        $region24: #{tpu_custom_call.1} parent=15 // pred_fallthru
          _
        // Predicated region
        $region25: #{tpu_custom_call.1} parent=15 // pred_check
          %p244 = pneg %p107
        $region26: #{tpu_custom_call.1} parent=15 // pred_check_branch
          %246 = sbr.rel (%p244) target = $region28
        $region27: #{tpu_custom_call.1} parent=15 // pred_region
          %s247 = sand.u32 %s21, 1
          %s248 = scalar_lea.sflag [#allocation6], %s247
          %s249 = sand.u32 %s97, 1
          %s250 = smul.addr %s249, 16
          %s251 = scalar_lea.vmem [#allocation7], %s250
          %s253 = ssub.s32 256, 256
          %254 = vsyncadd %s248, %s253
          %s255 = smul.addr %s29, 2
          %s256 = smul.addr %s255, 128
          %s257 = scalar_lea.hbm %s2, %s256
          %s258 = sshll.u32 %s251, 4
          %s259 = int_to_ptr.vmem [resolvable:$true] %s258
          %264 = dma.hbm_to_vmem [thread:$0]  %s257, 256, %s259, %s248, 128, 128, 8
        $region28: #{tpu_custom_call.1} parent=15 // pred_fallthru
          _
        // Predicated region
        $region29: #{tpu_custom_call.1} parent=15 // pred_check
          %p265 = pneg %p133
        $region30: #{tpu_custom_call.1} parent=15 // pred_check_branch
          %267 = sbr.rel (%p265) target = $region32
        $region31: #{tpu_custom_call.1} parent=15 // pred_region
          %s268 = sand.u32 %s123, 1
          %s269 = scalar_lea.sflag [#allocation9], %s268
          %s270 = sand.u32 %s123, 1
          %s271 = smul.addr %s270, 32
          %s272 = scalar_lea.vmem [#allocation8], %s271
          %s274 = ssub.s32 512, 512
          %275 = vsyncadd %s269, %s274
          %s276 = smul.addr %s28, 8
          %s277 = smul.addr %s276, 64
          %s278 = scalar_lea.hbm %s3, %s277
          %s279 = sshll.u32 %s272, 4
          %s280 = int_to_ptr.vmem [resolvable:$true] %s279
          %285 = dma.hbm_to_vmem [thread:$0]  %s278, 512, %s280, %s269, 64, 64, 4
        $region32: #{tpu_custom_call.1} parent=15 // pred_fallthru
          _
      $region16: #{tpu_custom_call.1} parent=5 // pred_fallthru
        _
      %p286 = scmp.le.s32.totalorder 1, %s21
      %p287 = scmp.lt.s32.totalorder %s21, 5
      %p288 = pnand %p286, %p287
      %p289 = pneg %p288
      // Predicated region
      $region33: #{tpu_custom_call.1} parent=5 // pred_check
        _
      $region34: #{tpu_custom_call.1} parent=5 // pred_check_branch
        %291 = sbr.rel (%p288) target = $region36
      $region35: #{tpu_custom_call.1} parent=5 // pred_region
        %s292 = ssub.s32 %s21, 1
        %s293 = sand.u32 %s48, 1
        %s294 = scalar_lea.sflag [#allocation4], %s293
        %s295 = sand.u32 %s48, 1
        %s296 = smul.addr %s295, 32
        %s297 = scalar_lea.vmem [#allocation3], %s296
        // Predicated region
        $region37: #{tpu_custom_call.1} parent=35 // pred_check
          %p298 = pneg %p61
        $region38: #{tpu_custom_call.1} parent=35 // pred_check_branch
          %300 = sbr.rel (%p298) target = $region40
        $region39: #{tpu_custom_call.1} parent=35 // pred_region
          %301 = dma.done %s294, 512
        $region40: #{tpu_custom_call.1} parent=35 // pred_fallthru
          _
        %s302 = sand.u32 %s26, 1
        %s303 = scalar_lea.sflag [#allocation6], %s302
        %s304 = sand.u32 %s74, 1
        %s305 = smul.addr %s304, 16
        %s306 = scalar_lea.vmem [#allocation5], %s305
        // Predicated region
        $region41: #{tpu_custom_call.1} parent=35 // pred_check
          %p307 = pneg %p87
        $region42: #{tpu_custom_call.1} parent=35 // pred_check_branch
          %309 = sbr.rel (%p307) target = $region44
        $region43: #{tpu_custom_call.1} parent=35 // pred_region
          %310 = dma.done %s303, 256
        $region44: #{tpu_custom_call.1} parent=35 // pred_fallthru
          _
        %s311 = sand.u32 %s26, 1
        %s312 = scalar_lea.sflag [#allocation6], %s311
        %s313 = sand.u32 %s100, 1
        %s314 = smul.addr %s313, 16
        %s315 = scalar_lea.vmem [#allocation7], %s314
        // Predicated region
        $region45: #{tpu_custom_call.1} parent=35 // pred_check
          %p316 = pneg %p113
        $region46: #{tpu_custom_call.1} parent=35 // pred_check_branch
          %318 = sbr.rel (%p316) target = $region48
        $region47: #{tpu_custom_call.1} parent=35 // pred_region
          %319 = dma.done %s312, 256
        $region48: #{tpu_custom_call.1} parent=35 // pred_fallthru
          _
        %s320 = sand.u32 %s126, 1
        %s321 = scalar_lea.sflag [#allocation9], %s320
        %s322 = sand.u32 %s126, 1
        %s323 = smul.addr %s322, 32
        %s324 = scalar_lea.vmem [#allocation8], %s323
        // Predicated region
        $region49: #{tpu_custom_call.1} parent=35 // pred_check
          %p325 = pneg %p139
        $region50: #{tpu_custom_call.1} parent=35 // pred_check_branch
          %327 = sbr.rel (%p325) target = $region52
        $region51: #{tpu_custom_call.1} parent=35 // pred_region
          %328 = dma.done %s321, 512
        $region52: #{tpu_custom_call.1} parent=35 // pred_fallthru
          _
        %s329 = sand.u32 %s48, 1
        %s330 = scalar_lea.sflag [#allocation4], %s329
        %s331 = sand.u32 %s48, 1
        %s332 = smul.addr %s331, 32
        %s333 = scalar_lea.vmem [#allocation3], %s332
        %p334 = pneg %p61
        %p335 = pneg %p58
        %s336 = sand.u32 %s26, 1
        %s337 = scalar_lea.sflag [#allocation6], %s336
        %s338 = sand.u32 %s74, 1
        %s339 = smul.addr %s338, 16
        %s340 = scalar_lea.vmem [#allocation5], %s339
        %p341 = pneg %p87
        %p342 = pneg %p84
        %s343 = sand.u32 %s26, 1
        %s344 = scalar_lea.sflag [#allocation6], %s343
        %s345 = sand.u32 %s100, 1
        %s346 = smul.addr %s345, 16
        %s347 = scalar_lea.vmem [#allocation7], %s346
        %p348 = pneg %p113
        %p349 = pneg %p110
        %s350 = sand.u32 %s126, 1
        %s351 = scalar_lea.sflag [#allocation9], %s350
        %s352 = sand.u32 %s126, 1
        %s353 = smul.addr %s352, 32
        %s354 = scalar_lea.vmem [#allocation8], %s353
        %p355 = pneg %p139
        %p356 = pneg %p136
        %p357 = pneg %p160
        %p358 = pneg %p157
        %p359 = pneg %p181
        %p360 = pneg %p178
        %p361 = scmp.eq.s32.totalorder %s30, 0
        %p362 = scmp.eq.s32.totalorder %s31, 0
        %p363 = pnand %p361, %p362
        %p364 = pneg %p363
        // Predicated region
        $region53: #{tpu_custom_call.1} parent=35 // pred_check
          _
        $region54: #{tpu_custom_call.1} parent=35 // pred_check_branch
          %366 = sbr.rel (%p363) target = $region56
        $region55: #{tpu_custom_call.1} parent=35 // pred_region
          %vm367 = vcmask 3072
          %368 = vst.msk [vmem:[%s4] sm:$0xf] %vm367, 0.0
          %369 = vst.msk [vmem:[%s4 + $0x4] sm:$0xf] %vm367, 0.0
          %370 = vst.msk [vmem:[%s5] sm:$0xf] %vm367, 0.0
          %371 = vst.msk [vmem:[%s5 + $0x4] sm:$0xf] %vm367, 0.0
        $region56: #{tpu_custom_call.1} parent=35 // pred_fallthru
          _
        %v372 = vld [vmem:[%s306] sm:$0xff]
        %v373 = vld [vmem:[%s306 + $0x8] sm:$0xff]
        %v374 = vld [vmem:[%s315] sm:$0xff]
        %v375 = vld [vmem:[%s315 + $0x8] sm:$0xff]
        %v376 = vld [vmem:[%s324] sm:$0xf]
        %v377 = vld [vmem:[%s324 + $0x4] sm:$0xf]
        %v378 = vld [vmem:[%s324 + $0x8] sm:$0xf]
        %v379 = vld [vmem:[%s324 + $0xc] sm:$0xf]
        %v380 = vld [vmem:[%s324 + $0x10] sm:$0xf]
        %v381 = vld [vmem:[%s324 + $0x14] sm:$0xf]
        %v382 = vld [vmem:[%s324 + $0x18] sm:$0xf]
        %v383 = vld [vmem:[%s324 + $0x1c] sm:$0xf]
        %v384 = vunpack.c.l.bf16 %v376
        %v385 = vunpack.c.l.bf16 %v377
        %v386 = vunpack.c.l.bf16 %v378
        %v387 = vunpack.c.l.bf16 %v379
        %v388 = vunpack.c.l.bf16 %v380
        %v389 = vunpack.c.l.bf16 %v381
        %v390 = vunpack.c.l.bf16 %v382
        %v391 = vunpack.c.l.bf16 %v383
        %v392 = vld [vmem:[%s297] sm:$0xf]
        %v393 = vld [vmem:[%s297 + $0x4] sm:$0xf]
        %v394 = vunpack.c.l.bf16 %v392
        %v395 = vunpack.c.l.bf16 %v393
        %vm396 = vcmask 130048
        %v398 = vsel %vm396, %v372, 0
        %v401 = vsel %vm396, %v373, 0
        %403 = vmatprep.subr.mxu0 0.0
        %404 = vmatpush1.msra.mxu0 %v394
        %405 = vmatprep.subr.mxu0 0.0
        %406 = vmatpush1.msra.mxu0 %v395
        %407 = vmatprep.subr.mxu0 0.0
        %408 = vmatpush1.msra.mxu0 0.0
        %409 = vmatprep.subr.mxu0 0.0
        %410 = vmatpush1.msra.mxu0 0.0
        %411 = vmatprep.subr.mxu0 0.0
        %412 = vmatpush1.msra.mxu0 0.0
        %413 = vmatprep.subr.mxu0 0.0
        %414 = vmatpush1.msra.mxu0 0.0
        %415 = vmatprep.subr.mxu0 0.0
        %416 = vmatpush1.msra.mxu0 0.0
        %417 = vmatprep.subr.mxu0 0.0
        %418 = vmatpush1.msra.mxu0 0.0
        %419 = vmatprep.subr.mxu0 0.0
        %420 = vmatpush1.msra.mxu0 0.0
        %421 = vmatprep.subr.mxu0 0.0
        %422 = vmatpush1.msra.mxu0 0.0
        %423 = vmatprep.subr.mxu0 0.0
        %424 = vmatpush1.msra.mxu0 0.0
        %425 = vmatprep.subr.mxu0 0.0
        %426 = vmatpush1.msra.mxu0 0.0
        %427 = vmatprep.subr.mxu0 0.0
        %428 = vmatpush1.msra.mxu0 0.0
        %429 = vmatprep.subr.mxu0 0.0
        %430 = vmatpush1.msra.mxu0 0.0
        %431 = vmatprep.subr.mxu0 0.0
        %432 = vmatpush1.msra.mxu0 0.0
        %433 = vmatprep.subr.mxu0 0.0
        %434 = vmatpush1.msra.mxu0 0.0
        %435 = vmatprep.subr.mxu0 0.0
        %436 = vmatpush1.msra.mxu0 0.0
        %437 = vmatprep.subr.mxu0 0.0
        %438 = vmatpush1.msra.mxu0 0.0
        %439 = vmatprep.subr.mxu0 0.0
        %440 = vmatpush1.msra.mxu0 0.0
        %441 = vmatprep.subr.mxu0 0.0
        %442 = vmatpush1.msra.mxu0 0.0
        %443 = vmatprep.subr.mxu0 0.0
        %444 = vmatpush1.msra.mxu0 0.0
        %445 = vmatprep.subr.mxu0 0.0
        %446 = vmatpush1.msra.mxu0 0.0
        %447 = vmatprep.subr.mxu0 0.0
        %448 = vmatpush1.msra.mxu0 0.0
        %449 = vmatprep.subr.mxu0 0.0
        %450 = vmatpush1.msra.mxu0 0.0
        %451 = vmatprep.subr.mxu0 0.0
        %452 = vmatpush1.msra.mxu0 0.0
        %453 = vmatprep.subr.mxu0 0.0
        %454 = vmatpush1.msra.mxu0 0.0
        %455 = vmatprep.subr.mxu0 0.0
        %456 = vmatpush1.msra.mxu0 0.0
        %457 = vmatprep.subr.mxu0 0.0
        %458 = vmatpush1.msra.mxu0 0.0
        %459 = vmatprep.subr.mxu0 0.0
        %460 = vmatpush1.msra.mxu0 0.0
        %461 = vmatprep.subr.mxu0 0.0
        %462 = vmatpush1.msra.mxu0 0.0
        %463 = vmatprep.subr.mxu0 0.0
        %464 = vmatpush1.msra.mxu0 0.0
        %465 = vmatprep.subr.mxu0 0.0
        %466 = vmatpush1.msra.mxu0 0.0
        %467 = vmatprep.mubr.f32.mxu0 0.0
        %468 = vmatmul.mubr.f32.gmra.mrb[0].mxu0 %v398
        %v469 = vpop.f32.mrb[0].mxu0
        %v470 = vadd.f32 0.0, %v469
        %v471 = vpop.f32.mrb[0].mxu0
        %472 = vmatprep.mubr.f32.mxu0 0.0
        %473 = vmatmul.mubr.f32.gmra.mrb[0].mxu0 %v401
        %v474 = vpop.f32.mrb[0].mxu0
        %v475 = vadd.f32 0.0, %v474
        %v476 = vpop.f32.mrb[0].mxu0
        %477 = vdwg.mxu0
        %v479 = vsel %vm396, %v470, 0
        %v482 = vsel %vm396, %v475, 0
        %484 = vmatprep.subr.mxu0 0.0
        %485 = vmatpush1.msra.mxu0 %v374
        %486 = vmatprep.subr.mxu0 0.0
        %487 = vmatpush1.msra.mxu0 %v375
        %488 = vmatprep.subr.mxu0 0.0
        %489 = vmatpush1.msra.mxu0 0.0
        %490 = vmatprep.subr.mxu0 0.0
        %491 = vmatpush1.msra.mxu0 0.0
        %492 = vmatprep.subr.mxu0 0.0
        %493 = vmatpush1.msra.mxu0 0.0
        %494 = vmatprep.subr.mxu0 0.0
        %495 = vmatpush1.msra.mxu0 0.0
        %496 = vmatprep.subr.mxu0 0.0
        %497 = vmatpush1.msra.mxu0 0.0
        %498 = vmatprep.subr.mxu0 0.0
        %499 = vmatpush1.msra.mxu0 0.0
        %500 = vmatprep.subr.mxu0 0.0
        %501 = vmatpush1.msra.mxu0 0.0
        %502 = vmatprep.subr.mxu0 0.0
        %503 = vmatpush1.msra.mxu0 0.0
        %504 = vmatprep.subr.mxu0 0.0
        %505 = vmatpush1.msra.mxu0 0.0
        %506 = vmatprep.subr.mxu0 0.0
        %507 = vmatpush1.msra.mxu0 0.0
        %508 = vmatprep.subr.mxu0 0.0
        %509 = vmatpush1.msra.mxu0 0.0
        %510 = vmatprep.subr.mxu0 0.0
        %511 = vmatpush1.msra.mxu0 0.0
        %512 = vmatprep.subr.mxu0 0.0
        %513 = vmatpush1.msra.mxu0 0.0
        %514 = vmatprep.subr.mxu0 0.0
        %515 = vmatpush1.msra.mxu0 0.0
        %516 = vmatprep.subr.mxu0 0.0
        %517 = vmatpush1.msra.mxu0 0.0
        %518 = vmatprep.subr.mxu0 0.0
        %519 = vmatpush1.msra.mxu0 0.0
        %520 = vmatprep.subr.mxu0 0.0
        %521 = vmatpush1.msra.mxu0 0.0
        %522 = vmatprep.subr.mxu0 0.0
        %523 = vmatpush1.msra.mxu0 0.0
        %524 = vmatprep.subr.mxu0 0.0
        %525 = vmatpush1.msra.mxu0 0.0
        %526 = vmatprep.subr.mxu0 0.0
        %527 = vmatpush1.msra.mxu0 0.0
        %528 = vmatprep.subr.mxu0 0.0
        %529 = vmatpush1.msra.mxu0 0.0
        %530 = vmatprep.subr.mxu0 0.0
        %531 = vmatpush1.msra.mxu0 0.0
        %532 = vmatprep.subr.mxu0 0.0
        %533 = vmatpush1.msra.mxu0 0.0
        %534 = vmatprep.subr.mxu0 0.0
        %535 = vmatpush1.msra.mxu0 0.0
        %536 = vmatprep.subr.mxu0 0.0
        %537 = vmatpush1.msra.mxu0 0.0
        %538 = vmatprep.subr.mxu0 0.0
        %539 = vmatpush1.msra.mxu0 0.0
        %540 = vmatprep.subr.mxu0 0.0
        %541 = vmatpush1.msra.mxu0 0.0
        %542 = vmatprep.subr.mxu0 0.0
        %543 = vmatpush1.msra.mxu0 0.0
        %544 = vmatprep.subr.mxu0 0.0
        %545 = vmatpush1.msra.mxu0 0.0
        %546 = vmatprep.subr.mxu0 0.0
        %547 = vmatpush1.msra.mxu0 0.0
        %548 = vmatprep.mubr.f32.mxu0 0.0
        %549 = vmatmul.mubr.f32.gmra.mrb[0].mxu0 %v479
        %v550 = vpop.f32.mrb[0].mxu0
        %v551 = vadd.f32 0.0, %v550
        %v552 = vpop.f32.mrb[0].mxu0
        %553 = vmatprep.mubr.f32.mxu0 0.0
        %554 = vmatmul.mubr.f32.gmra.mrb[0].mxu0 %v482
        %v555 = vpop.f32.mrb[0].mxu0
        %v556 = vadd.f32 0.0, %v555
        %v557 = vpop.f32.mrb[0].mxu0
        %558 = vdwg.mxu0
        %559 = vst.msk [vmem:[#allocation2] sm:$0xff] %vm396, %v551
        %560 = vst.msk [vmem:[#allocation2 + $0x8] sm:$0xff] %vm396, %v556
        %s561 = scalar_lea.vmem %s297, 8 [#allocation3]
        %v562 = vld [vmem:[%s561] sm:$0xf]
        %v563 = vld [vmem:[%s561 + $0x4] sm:$0xf]
        %v564 = vunpack.c.l.bf16 %v562
        %v565 = vunpack.c.l.bf16 %v563
        %566 = vmatprep.subr.mxu0 0.0
        %567 = vmatpush1.msra.mxu0 %v564
        %568 = vmatprep.subr.mxu0 0.0
        %569 = vmatpush1.msra.mxu0 %v565
        %570 = vmatprep.subr.mxu0 0.0
        %571 = vmatpush1.msra.mxu0 0.0
        %572 = vmatprep.subr.mxu0 0.0
        %573 = vmatpush1.msra.mxu0 0.0
        %574 = vmatprep.subr.mxu0 0.0
        %575 = vmatpush1.msra.mxu0 0.0
        %576 = vmatprep.subr.mxu0 0.0
        %577 = vmatpush1.msra.mxu0 0.0
        %578 = vmatprep.subr.mxu0 0.0
        %579 = vmatpush1.msra.mxu0 0.0
        %580 = vmatprep.subr.mxu0 0.0
        %581 = vmatpush1.msra.mxu0 0.0
        %582 = vmatprep.subr.mxu0 0.0
        %583 = vmatpush1.msra.mxu0 0.0
        %584 = vmatprep.subr.mxu0 0.0
        %585 = vmatpush1.msra.mxu0 0.0
        %586 = vmatprep.subr.mxu0 0.0
        %587 = vmatpush1.msra.mxu0 0.0
        %588 = vmatprep.subr.mxu0 0.0
        %589 = vmatpush1.msra.mxu0 0.0
        %590 = vmatprep.subr.mxu0 0.0
        %591 = vmatpush1.msra.mxu0 0.0
        %592 = vmatprep.subr.mxu0 0.0
        %593 = vmatpush1.msra.mxu0 0.0
        %594 = vmatprep.subr.mxu0 0.0
        %595 = vmatpush1.msra.mxu0 0.0
        %596 = vmatprep.subr.mxu0 0.0
        %597 = vmatpush1.msra.mxu0 0.0
        %598 = vmatprep.subr.mxu0 0.0
        %599 = vmatpush1.msra.mxu0 0.0
        %600 = vmatprep.subr.mxu0 0.0
        %601 = vmatpush1.msra.mxu0 0.0
        %602 = vmatprep.subr.mxu0 0.0
        %603 = vmatpush1.msra.mxu0 0.0
        %604 = vmatprep.subr.mxu0 0.0
        %605 = vmatpush1.msra.mxu0 0.0
        %606 = vmatprep.subr.mxu0 0.0
        %607 = vmatpush1.msra.mxu0 0.0
        %608 = vmatprep.subr.mxu0 0.0
        %609 = vmatpush1.msra.mxu0 0.0
        %610 = vmatprep.subr.mxu0 0.0
        %611 = vmatpush1.msra.mxu0 0.0
        %612 = vmatprep.subr.mxu0 0.0
        %613 = vmatpush1.msra.mxu0 0.0
        %614 = vmatprep.subr.mxu0 0.0
        %615 = vmatpush1.msra.mxu0 0.0
        %616 = vmatprep.subr.mxu0 0.0
        %617 = vmatpush1.msra.mxu0 0.0
        %618 = vmatprep.subr.mxu0 0.0
        %619 = vmatpush1.msra.mxu0 0.0
        %620 = vmatprep.subr.mxu0 0.0
        %621 = vmatpush1.msra.mxu0 0.0
        %622 = vmatprep.subr.mxu0 0.0
        %623 = vmatpush1.msra.mxu0 0.0
        %624 = vmatprep.subr.mxu0 0.0
        %625 = vmatpush1.msra.mxu0 0.0
        %626 = vmatprep.subr.mxu0 0.0
        %627 = vmatpush1.msra.mxu0 0.0
        %628 = vmatprep.subr.mxu0 0.0
        %629 = vmatpush1.msra.mxu0 0.0
        %630 = vmatprep.mubr.f32.mxu0 0.0
        %631 = vmatmul.mubr.f32.gmra.mrb[0].mxu0 %v398
        %v632 = vpop.f32.mrb[0].mxu0
        %v633 = vadd.f32 0.0, %v632
        %v634 = vpop.f32.mrb[0].mxu0
        %635 = vmatprep.mubr.f32.mxu0 0.0
        %636 = vmatmul.mubr.f32.gmra.mrb[0].mxu0 %v401
        %v637 = vpop.f32.mrb[0].mxu0
        %v638 = vadd.f32 0.0, %v637
        %v639 = vpop.f32.mrb[0].mxu0
        %640 = vdwg.mxu0
        %v642 = vsel %vm396, %v633, 0
        %v645 = vsel %vm396, %v638, 0
        %647 = vmatprep.subr.mxu0 0.0
        %648 = vmatpush1.msra.mxu0 %v374
        %649 = vmatprep.subr.mxu0 0.0
        %650 = vmatpush1.msra.mxu0 %v375
        %651 = vmatprep.subr.mxu0 0.0
        %652 = vmatpush1.msra.mxu0 0.0
        %653 = vmatprep.subr.mxu0 0.0
        %654 = vmatpush1.msra.mxu0 0.0
        %655 = vmatprep.subr.mxu0 0.0
        %656 = vmatpush1.msra.mxu0 0.0
        %657 = vmatprep.subr.mxu0 0.0
        %658 = vmatpush1.msra.mxu0 0.0
        %659 = vmatprep.subr.mxu0 0.0
        %660 = vmatpush1.msra.mxu0 0.0
        %661 = vmatprep.subr.mxu0 0.0
        %662 = vmatpush1.msra.mxu0 0.0
        %663 = vmatprep.subr.mxu0 0.0
        %664 = vmatpush1.msra.mxu0 0.0
        %665 = vmatprep.subr.mxu0 0.0
        %666 = vmatpush1.msra.mxu0 0.0
        %667 = vmatprep.subr.mxu0 0.0
        %668 = vmatpush1.msra.mxu0 0.0
        %669 = vmatprep.subr.mxu0 0.0
        %670 = vmatpush1.msra.mxu0 0.0
        %671 = vmatprep.subr.mxu0 0.0
        %672 = vmatpush1.msra.mxu0 0.0
        %673 = vmatprep.subr.mxu0 0.0
        %674 = vmatpush1.msra.mxu0 0.0
        %675 = vmatprep.subr.mxu0 0.0
        %676 = vmatpush1.msra.mxu0 0.0
        %677 = vmatprep.subr.mxu0 0.0
        %678 = vmatpush1.msra.mxu0 0.0
        %679 = vmatprep.subr.mxu0 0.0
        %680 = vmatpush1.msra.mxu0 0.0
        %681 = vmatprep.subr.mxu0 0.0
        %682 = vmatpush1.msra.mxu0 0.0
        %683 = vmatprep.subr.mxu0 0.0
        %684 = vmatpush1.msra.mxu0 0.0
        %685 = vmatprep.subr.mxu0 0.0
        %686 = vmatpush1.msra.mxu0 0.0
        %687 = vmatprep.subr.mxu0 0.0
        %688 = vmatpush1.msra.mxu0 0.0
        %689 = vmatprep.subr.mxu0 0.0
        %690 = vmatpush1.msra.mxu0 0.0
        %691 = vmatprep.subr.mxu0 0.0
        %692 = vmatpush1.msra.mxu0 0.0
        %693 = vmatprep.subr.mxu0 0.0
        %694 = vmatpush1.msra.mxu0 0.0
        %695 = vmatprep.subr.mxu0 0.0
        %696 = vmatpush1.msra.mxu0 0.0
        %697 = vmatprep.subr.mxu0 0.0
        %698 = vmatpush1.msra.mxu0 0.0
        %699 = vmatprep.subr.mxu0 0.0
        %700 = vmatpush1.msra.mxu0 0.0
        %701 = vmatprep.subr.mxu0 0.0
        %702 = vmatpush1.msra.mxu0 0.0
        %703 = vmatprep.subr.mxu0 0.0
        %704 = vmatpush1.msra.mxu0 0.0
        %705 = vmatprep.subr.mxu0 0.0
        %706 = vmatpush1.msra.mxu0 0.0
        %707 = vmatprep.subr.mxu0 0.0
        %708 = vmatpush1.msra.mxu0 0.0
        %709 = vmatprep.subr.mxu0 0.0
        %710 = vmatpush1.msra.mxu0 0.0
        %711 = vmatprep.mubr.f32.mxu0 0.0
        %712 = vmatmul.mubr.f32.gmra.mrb[0].mxu0 %v642
        %v713 = vpop.f32.mrb[0].mxu0
        %v714 = vadd.f32 0.0, %v713
        %v715 = vpop.f32.mrb[0].mxu0
        %716 = vmatprep.mubr.f32.mxu0 0.0
        %717 = vmatmul.mubr.f32.gmra.mrb[0].mxu0 %v645
        %v718 = vpop.f32.mrb[0].mxu0
        %v719 = vadd.f32 0.0, %v718
        %v720 = vpop.f32.mrb[0].mxu0
        %721 = vdwg.mxu0
        %s722 = scalar_lea.vmem [#allocation2], 16
        %723 = vst.msk [vmem:[%s722] sm:$0xff] %vm396, %v714
        %724 = vst.msk [vmem:[%s722 + $0x8] sm:$0xff] %vm396, %v719
        %s725 = scalar_lea.vmem %s297, 16 [#allocation3]
        %v726 = vld [vmem:[%s725] sm:$0xf]
        %v727 = vld [vmem:[%s725 + $0x4] sm:$0xf]
        %v728 = vunpack.c.l.bf16 %v726
        %v729 = vunpack.c.l.bf16 %v727
        %730 = vmatprep.subr.mxu0 0.0
        %731 = vmatpush1.msra.mxu0 %v728
        %732 = vmatprep.subr.mxu0 0.0
        %733 = vmatpush1.msra.mxu0 %v729
        %734 = vmatprep.subr.mxu0 0.0
        %735 = vmatpush1.msra.mxu0 0.0
        %736 = vmatprep.subr.mxu0 0.0
        %737 = vmatpush1.msra.mxu0 0.0
        %738 = vmatprep.subr.mxu0 0.0
        %739 = vmatpush1.msra.mxu0 0.0
        %740 = vmatprep.subr.mxu0 0.0
        %741 = vmatpush1.msra.mxu0 0.0
        %742 = vmatprep.subr.mxu0 0.0
        %743 = vmatpush1.msra.mxu0 0.0
        %744 = vmatprep.subr.mxu0 0.0
        %745 = vmatpush1.msra.mxu0 0.0
        %746 = vmatprep.subr.mxu0 0.0
        %747 = vmatpush1.msra.mxu0 0.0
        %748 = vmatprep.subr.mxu0 0.0
        %749 = vmatpush1.msra.mxu0 0.0
        %750 = vmatprep.subr.mxu0 0.0
        %751 = vmatpush1.msra.mxu0 0.0
        %752 = vmatprep.subr.mxu0 0.0
        %753 = vmatpush1.msra.mxu0 0.0
        %754 = vmatprep.subr.mxu0 0.0
        %755 = vmatpush1.msra.mxu0 0.0
        %756 = vmatprep.subr.mxu0 0.0
        %757 = vmatpush1.msra.mxu0 0.0
        %758 = vmatprep.subr.mxu0 0.0
        %759 = vmatpush1.msra.mxu0 0.0
        %760 = vmatprep.subr.mxu0 0.0
        %761 = vmatpush1.msra.mxu0 0.0
        %762 = vmatprep.subr.mxu0 0.0
        %763 = vmatpush1.msra.mxu0 0.0
        %764 = vmatprep.subr.mxu0 0.0
        %765 = vmatpush1.msra.mxu0 0.0
        %766 = vmatprep.subr.mxu0 0.0
        %767 = vmatpush1.msra.mxu0 0.0
        %768 = vmatprep.subr.mxu0 0.0
        %769 = vmatpush1.msra.mxu0 0.0
        %770 = vmatprep.subr.mxu0 0.0
        %771 = vmatpush1.msra.mxu0 0.0
        %772 = vmatprep.subr.mxu0 0.0
        %773 = vmatpush1.msra.mxu0 0.0
        %774 = vmatprep.subr.mxu0 0.0
        %775 = vmatpush1.msra.mxu0 0.0
        %776 = vmatprep.subr.mxu0 0.0
        %777 = vmatpush1.msra.mxu0 0.0
        %778 = vmatprep.subr.mxu0 0.0
        %779 = vmatpush1.msra.mxu0 0.0
        %780 = vmatprep.subr.mxu0 0.0
        %781 = vmatpush1.msra.mxu0 0.0
        %782 = vmatprep.subr.mxu0 0.0
        %783 = vmatpush1.msra.mxu0 0.0
        %784 = vmatprep.subr.mxu0 0.0
        %785 = vmatpush1.msra.mxu0 0.0
        %786 = vmatprep.subr.mxu0 0.0
        %787 = vmatpush1.msra.mxu0 0.0
        %788 = vmatprep.subr.mxu0 0.0
        %789 = vmatpush1.msra.mxu0 0.0
        %790 = vmatprep.subr.mxu0 0.0
        %791 = vmatpush1.msra.mxu0 0.0
        %792 = vmatprep.subr.mxu0 0.0
        %793 = vmatpush1.msra.mxu0 0.0
        %794 = vmatprep.mubr.f32.mxu0 0.0
        %795 = vmatmul.mubr.f32.gmra.mrb[0].mxu0 %v398
        %v796 = vpop.f32.mrb[0].mxu0
        %v797 = vadd.f32 0.0, %v796
        %v798 = vpop.f32.mrb[0].mxu0
        %799 = vmatprep.mubr.f32.mxu0 0.0
        %800 = vmatmul.mubr.f32.gmra.mrb[0].mxu0 %v401
        %v801 = vpop.f32.mrb[0].mxu0
        %v802 = vadd.f32 0.0, %v801
        %v803 = vpop.f32.mrb[0].mxu0
        %804 = vdwg.mxu0
        %v806 = vsel %vm396, %v797, 0
        %v809 = vsel %vm396, %v802, 0
        %811 = vmatprep.subr.mxu0 0.0
        %812 = vmatpush1.msra.mxu0 %v374
        %813 = vmatprep.subr.mxu0 0.0
        %814 = vmatpush1.msra.mxu0 %v375
        %815 = vmatprep.subr.mxu0 0.0
        %816 = vmatpush1.msra.mxu0 0.0
        %817 = vmatprep.subr.mxu0 0.0
        %818 = vmatpush1.msra.mxu0 0.0
        %819 = vmatprep.subr.mxu0 0.0
        %820 = vmatpush1.msra.mxu0 0.0
        %821 = vmatprep.subr.mxu0 0.0
        %822 = vmatpush1.msra.mxu0 0.0
        %823 = vmatprep.subr.mxu0 0.0
        %824 = vmatpush1.msra.mxu0 0.0
        %825 = vmatprep.subr.mxu0 0.0
        %826 = vmatpush1.msra.mxu0 0.0
        %827 = vmatprep.subr.mxu0 0.0
        %828 = vmatpush1.msra.mxu0 0.0
        %829 = vmatprep.subr.mxu0 0.0
        %830 = vmatpush1.msra.mxu0 0.0
        %831 = vmatprep.subr.mxu0 0.0
        %832 = vmatpush1.msra.mxu0 0.0
        %833 = vmatprep.subr.mxu0 0.0
        %834 = vmatpush1.msra.mxu0 0.0
        %835 = vmatprep.subr.mxu0 0.0
        %836 = vmatpush1.msra.mxu0 0.0
        %837 = vmatprep.subr.mxu0 0.0
        %838 = vmatpush1.msra.mxu0 0.0
        %839 = vmatprep.subr.mxu0 0.0
        %840 = vmatpush1.msra.mxu0 0.0
        %841 = vmatprep.subr.mxu0 0.0
        %842 = vmatpush1.msra.mxu0 0.0
        %843 = vmatprep.subr.mxu0 0.0
        %844 = vmatpush1.msra.mxu0 0.0
        %845 = vmatprep.subr.mxu0 0.0
        %846 = vmatpush1.msra.mxu0 0.0
        %847 = vmatprep.subr.mxu0 0.0
        %848 = vmatpush1.msra.mxu0 0.0
        %849 = vmatprep.subr.mxu0 0.0
        %850 = vmatpush1.msra.mxu0 0.0
        %851 = vmatprep.subr.mxu0 0.0
        %852 = vmatpush1.msra.mxu0 0.0
        %853 = vmatprep.subr.mxu0 0.0
        %854 = vmatpush1.msra.mxu0 0.0
        %855 = vmatprep.subr.mxu0 0.0
        %856 = vmatpush1.msra.mxu0 0.0
        %857 = vmatprep.subr.mxu0 0.0
        %858 = vmatpush1.msra.mxu0 0.0
        %859 = vmatprep.subr.mxu0 0.0
        %860 = vmatpush1.msra.mxu0 0.0
        %861 = vmatprep.subr.mxu0 0.0
        %862 = vmatpush1.msra.mxu0 0.0
        %863 = vmatprep.subr.mxu0 0.0
        %864 = vmatpush1.msra.mxu0 0.0
        %865 = vmatprep.subr.mxu0 0.0
        %866 = vmatpush1.msra.mxu0 0.0
        %867 = vmatprep.subr.mxu0 0.0
        %868 = vmatpush1.msra.mxu0 0.0
        %869 = vmatprep.subr.mxu0 0.0
        %870 = vmatpush1.msra.mxu0 0.0
        %871 = vmatprep.subr.mxu0 0.0
        %872 = vmatpush1.msra.mxu0 0.0
        %873 = vmatprep.subr.mxu0 0.0
        %874 = vmatpush1.msra.mxu0 0.0
        %875 = vmatprep.mubr.f32.mxu0 0.0
        %876 = vmatmul.mubr.f32.gmra.mrb[0].mxu0 %v806
        %v877 = vpop.f32.mrb[0].mxu0
        %v878 = vadd.f32 0.0, %v877
        %v879 = vpop.f32.mrb[0].mxu0
        %880 = vmatprep.mubr.f32.mxu0 0.0
        %881 = vmatmul.mubr.f32.gmra.mrb[0].mxu0 %v809
        %v882 = vpop.f32.mrb[0].mxu0
        %v883 = vadd.f32 0.0, %v882
        %v884 = vpop.f32.mrb[0].mxu0
        %885 = vdwg.mxu0
        %s886 = scalar_lea.vmem [#allocation2], 32
        %887 = vst.msk [vmem:[%s886] sm:$0xff] %vm396, %v878
        %888 = vst.msk [vmem:[%s886 + $0x8] sm:$0xff] %vm396, %v883
        %s889 = scalar_lea.vmem %s297, 24 [#allocation3]
        %v890 = vld [vmem:[%s889] sm:$0xf]
        %v891 = vld [vmem:[%s889 + $0x4] sm:$0xf]
        %v892 = vunpack.c.l.bf16 %v890
        %v893 = vunpack.c.l.bf16 %v891
        %894 = vmatprep.subr.mxu0 0.0
        %895 = vmatpush1.msra.mxu0 %v892
        %896 = vmatprep.subr.mxu0 0.0
        %897 = vmatpush1.msra.mxu0 %v893
        %898 = vmatprep.subr.mxu0 0.0
        %899 = vmatpush1.msra.mxu0 0.0
        %900 = vmatprep.subr.mxu0 0.0
        %901 = vmatpush1.msra.mxu0 0.0
        %902 = vmatprep.subr.mxu0 0.0
        %903 = vmatpush1.msra.mxu0 0.0
        %904 = vmatprep.subr.mxu0 0.0
        %905 = vmatpush1.msra.mxu0 0.0
        %906 = vmatprep.subr.mxu0 0.0
        %907 = vmatpush1.msra.mxu0 0.0
        %908 = vmatprep.subr.mxu0 0.0
        %909 = vmatpush1.msra.mxu0 0.0
        %910 = vmatprep.subr.mxu0 0.0
        %911 = vmatpush1.msra.mxu0 0.0
        %912 = vmatprep.subr.mxu0 0.0
        %913 = vmatpush1.msra.mxu0 0.0
        %914 = vmatprep.subr.mxu0 0.0
        %915 = vmatpush1.msra.mxu0 0.0
        %916 = vmatprep.subr.mxu0 0.0
        %917 = vmatpush1.msra.mxu0 0.0
        %918 = vmatprep.subr.mxu0 0.0
        %919 = vmatpush1.msra.mxu0 0.0
        %920 = vmatprep.subr.mxu0 0.0
        %921 = vmatpush1.msra.mxu0 0.0
        %922 = vmatprep.subr.mxu0 0.0
        %923 = vmatpush1.msra.mxu0 0.0
        %924 = vmatprep.subr.mxu0 0.0
        %925 = vmatpush1.msra.mxu0 0.0
        %926 = vmatprep.subr.mxu0 0.0
        %927 = vmatpush1.msra.mxu0 0.0
        %928 = vmatprep.subr.mxu0 0.0
        %929 = vmatpush1.msra.mxu0 0.0
        %930 = vmatprep.subr.mxu0 0.0
        %931 = vmatpush1.msra.mxu0 0.0
        %932 = vmatprep.subr.mxu0 0.0
        %933 = vmatpush1.msra.mxu0 0.0
        %934 = vmatprep.subr.mxu0 0.0
        %935 = vmatpush1.msra.mxu0 0.0
        %936 = vmatprep.subr.mxu0 0.0
        %937 = vmatpush1.msra.mxu0 0.0
        %938 = vmatprep.subr.mxu0 0.0
        %939 = vmatpush1.msra.mxu0 0.0
        %940 = vmatprep.subr.mxu0 0.0
        %941 = vmatpush1.msra.mxu0 0.0
        %942 = vmatprep.subr.mxu0 0.0
        %943 = vmatpush1.msra.mxu0 0.0
        %944 = vmatprep.subr.mxu0 0.0
        %945 = vmatpush1.msra.mxu0 0.0
        %946 = vmatprep.subr.mxu0 0.0
        %947 = vmatpush1.msra.mxu0 0.0
        %948 = vmatprep.subr.mxu0 0.0
        %949 = vmatpush1.msra.mxu0 0.0
        %950 = vmatprep.subr.mxu0 0.0
        %951 = vmatpush1.msra.mxu0 0.0
        %952 = vmatprep.subr.mxu0 0.0
        %953 = vmatpush1.msra.mxu0 0.0
        %954 = vmatprep.subr.mxu0 0.0
        %955 = vmatpush1.msra.mxu0 0.0
        %956 = vmatprep.subr.mxu0 0.0
        %957 = vmatpush1.msra.mxu0 0.0
        %958 = vmatprep.mubr.f32.mxu0 0.0
        %959 = vmatmul.mubr.f32.gmra.mrb[0].mxu0 %v398
        %v960 = vpop.f32.mrb[0].mxu0
        %v961 = vadd.f32 0.0, %v960
        %v962 = vpop.f32.mrb[0].mxu0
        %963 = vmatprep.mubr.f32.mxu0 0.0
        %964 = vmatmul.mubr.f32.gmra.mrb[0].mxu0 %v401
        %v965 = vpop.f32.mrb[0].mxu0
        %v966 = vadd.f32 0.0, %v965
        %v967 = vpop.f32.mrb[0].mxu0
        %968 = vdwg.mxu0
        %v970 = vsel %vm396, %v961, 0
        %v973 = vsel %vm396, %v966, 0
        %975 = vmatprep.subr.mxu0 0.0
        %976 = vmatpush1.msra.mxu0 %v374
        %977 = vmatprep.subr.mxu0 0.0
        %978 = vmatpush1.msra.mxu0 %v375
        %979 = vmatprep.subr.mxu0 0.0
        %980 = vmatpush1.msra.mxu0 0.0
        %981 = vmatprep.subr.mxu0 0.0
        %982 = vmatpush1.msra.mxu0 0.0
        %983 = vmatprep.subr.mxu0 0.0
        %984 = vmatpush1.msra.mxu0 0.0
        %985 = vmatprep.subr.mxu0 0.0
        %986 = vmatpush1.msra.mxu0 0.0
        %987 = vmatprep.subr.mxu0 0.0
        %988 = vmatpush1.msra.mxu0 0.0
        %989 = vmatprep.subr.mxu0 0.0
        %990 = vmatpush1.msra.mxu0 0.0
        %991 = vmatprep.subr.mxu0 0.0
        %992 = vmatpush1.msra.mxu0 0.0
        %993 = vmatprep.subr.mxu0 0.0
        %994 = vmatpush1.msra.mxu0 0.0
        %995 = vmatprep.subr.mxu0 0.0
        %996 = vmatpush1.msra.mxu0 0.0
        %997 = vmatprep.subr.mxu0 0.0
        %998 = vmatpush1.msra.mxu0 0.0
        %999 = vmatprep.subr.mxu0 0.0
        %1000 = vmatpush1.msra.mxu0 0.0
        %1001 = vmatprep.subr.mxu0 0.0
        %1002 = vmatpush1.msra.mxu0 0.0
        %1003 = vmatprep.subr.mxu0 0.0
        %1004 = vmatpush1.msra.mxu0 0.0
        %1005 = vmatprep.subr.mxu0 0.0
        %1006 = vmatpush1.msra.mxu0 0.0
        %1007 = vmatprep.subr.mxu0 0.0
        %1008 = vmatpush1.msra.mxu0 0.0
        %1009 = vmatprep.subr.mxu0 0.0
        %1010 = vmatpush1.msra.mxu0 0.0
        %1011 = vmatprep.subr.mxu0 0.0
        %1012 = vmatpush1.msra.mxu0 0.0
        %1013 = vmatprep.subr.mxu0 0.0
        %1014 = vmatpush1.msra.mxu0 0.0
        %1015 = vmatprep.subr.mxu0 0.0
        %1016 = vmatpush1.msra.mxu0 0.0
        %1017 = vmatprep.subr.mxu0 0.0
        %1018 = vmatpush1.msra.mxu0 0.0
        %1019 = vmatprep.subr.mxu0 0.0
        %1020 = vmatpush1.msra.mxu0 0.0
        %1021 = vmatprep.subr.mxu0 0.0
        %1022 = vmatpush1.msra.mxu0 0.0
        %1023 = vmatprep.subr.mxu0 0.0
        %1024 = vmatpush1.msra.mxu0 0.0
        %1025 = vmatprep.subr.mxu0 0.0
        %1026 = vmatpush1.msra.mxu0 0.0
        %1027 = vmatprep.subr.mxu0 0.0
        %1028 = vmatpush1.msra.mxu0 0.0
        %1029 = vmatprep.subr.mxu0 0.0
        %1030 = vmatpush1.msra.mxu0 0.0
        %1031 = vmatprep.subr.mxu0 0.0
        %1032 = vmatpush1.msra.mxu0 0.0
        %1033 = vmatprep.subr.mxu0 0.0
        %1034 = vmatpush1.msra.mxu0 0.0
        %1035 = vmatprep.subr.mxu0 0.0
        %1036 = vmatpush1.msra.mxu0 0.0
        %1037 = vmatprep.subr.mxu0 0.0
        %1038 = vmatpush1.msra.mxu0 0.0
        %1039 = vmatprep.mubr.f32.mxu0 0.0
        %1040 = vmatmul.mubr.f32.gmra.mrb[0].mxu0 %v970
        %v1041 = vpop.f32.mrb[0].mxu0
        %v1042 = vadd.f32 0.0, %v1041
        %v1043 = vpop.f32.mrb[0].mxu0
        %1044 = vmatprep.mubr.f32.mxu0 0.0
        %1045 = vmatmul.mubr.f32.gmra.mrb[0].mxu0 %v973
        %v1046 = vpop.f32.mrb[0].mxu0
        %v1047 = vadd.f32 0.0, %v1046
        %v1048 = vpop.f32.mrb[0].mxu0
        %1049 = vdwg.mxu0
        %s1050 = scalar_lea.vmem [#allocation2], 48
        %1051 = vst.msk [vmem:[%s1050] sm:$0xff] %vm396, %v1042
        %1052 = vst.msk [vmem:[%s1050 + $0x8] sm:$0xff] %vm396, %v1047
        %v1053 = vld [vmem:[#allocation2] sm:$0xff]
        %v1054 = vld [vmem:[#allocation2 + $0x8] sm:$0xff]
        %v1055 = vld [vmem:[#allocation2 + $0x10] sm:$0xff]
        %v1056 = vld [vmem:[#allocation2 + $0x18] sm:$0xff]
        %v1057 = vld [vmem:[#allocation2 + $0x20] sm:$0xff]
        %v1058 = vld [vmem:[#allocation2 + $0x28] sm:$0xff]
        %v1059 = vld [vmem:[#allocation2 + $0x30] sm:$0xff]
        %v1060 = vld [vmem:[#allocation2 + $0x38] sm:$0xff]
        %v1061 = vsel %vm396, %v1053, -inf
        %v1062 = vsel %vm396, %v1055, -inf
        %v1063 = vsel %vm396, %v1057, -inf
        %v1064 = vmax.f32 %v1061, %v1063
        %v1065 = vsel %vm396, %v1059, -inf
        %v1066 = vmax.f32 %v1062, %v1065
        %v1067 = vmax.f32 %v1064, %v1066
        %v1068 = vsel %vm396, %v1054, -inf
        %v1069 = vsel %vm396, %v1056, -inf
        %v1070 = vsel %vm396, %v1058, -inf
        %v1071 = vmax.f32 %v1068, %v1070
        %v1072 = vsel %vm396, %v1060, -inf
        %v1073 = vmax.f32 %v1069, %v1072
        %v1074 = vmax.f32 %v1071, %v1073
        %v1075 = vsub.f32 %v1053, %v1067
        %v1076 = vsub.f32 %v1054, %v1074
        %v1077 = vsub.f32 %v1055, %v1067
        %v1078 = vsub.f32 %v1056, %v1074
        %v1079 = vsub.f32 %v1057, %v1067
        %v1080 = vsub.f32 %v1058, %v1074
        %v1081 = vsub.f32 %v1059, %v1067
        %v1082 = vsub.f32 %v1060, %v1074
        %v1083 = vmul.f32 %v1075, 1.442695
        %v1084 = vpow.pop %v1083
        %v1085 = vmul.f32 %v1076, 1.442695
        %v1086 = vpow.pop %v1085
        %v1087 = vmul.f32 %v1077, 1.442695
        %v1088 = vpow.pop %v1087
        %v1089 = vmul.f32 %v1078, 1.442695
        %v1090 = vpow.pop %v1089
        %v1091 = vmul.f32 %v1079, 1.442695
        %v1092 = vpow.pop %v1091
        %v1093 = vmul.f32 %v1080, 1.442695
        %v1094 = vpow.pop %v1093
        %v1095 = vmul.f32 %v1081, 1.442695
        %v1096 = vpow.pop %v1095
        %v1097 = vmul.f32 %v1082, 1.442695
        %v1098 = vpow.pop %v1097
        %v1099 = vsel %vm396, %v1084, 0.0
        %v1100 = vsel %vm396, %v1088, 0.0
        %v1101 = vadd.f32 %v1099, %v1100
        %v1102 = vsel %vm396, %v1092, 0.0
        %v1103 = vadd.f32 %v1101, %v1102
        %v1104 = vsel %vm396, %v1096, 0.0
        %v1105 = vadd.f32 %v1103, %v1104
        %v1106 = vsel %vm396, %v1086, 0.0
        %v1107 = vsel %vm396, %v1090, 0.0
        %v1108 = vadd.f32 %v1106, %v1107
        %v1109 = vsel %vm396, %v1094, 0.0
        %v1110 = vadd.f32 %v1108, %v1109
        %v1111 = vsel %vm396, %v1098, 0.0
        %v1112 = vadd.f32 %v1110, %v1111
        %v1113 = vrcp.pop %v1105
        %v1114 = vrcp.pop %v1112
        %v1115 = vmul.f32 %v1084, %v1113
        %v1116 = vmul.f32 %v1086, %v1114
        %v1117 = vmul.f32 %v1088, %v1113
        %v1118 = vmul.f32 %v1090, %v1114
        %v1119 = vmul.f32 %v1092, %v1113
        %v1120 = vmul.f32 %v1094, %v1114
        %v1121 = vmul.f32 %v1096, %v1113
        %v1122 = vmul.f32 %v1098, %v1114
        %v1123 = vmul.f32 %v1115, %v384
        %v1124 = vmul.f32 %v1116, %v385
        %v1125 = vmul.f32 %v1117, %v386
        %v1126 = vmul.f32 %v1118, %v387
        %v1127 = vmul.f32 %v1119, %v388
        %v1128 = vmul.f32 %v1120, %v389
        %v1129 = vmul.f32 %v1121, %v390
        %v1130 = vmul.f32 %v1122, %v391
        %v1131 = vsel %vm396, %v1123, 0.0
        %1132 = vadd.xlane.f32.xlu0 %v1131
        %v1133 = vpop.xlane.xlu0 %1132
        %v1134 = vsel %vm396, %v1124, 0.0
        %1135 = vadd.xlane.f32.xlu0 %v1134
        %v1136 = vpop.xlane.xlu0 %1135
        %v1137 = vsel %vm396, %v1125, 0.0
        %1138 = vadd.xlane.f32.xlu0 %v1137
        %v1139 = vpop.xlane.xlu0 %1138
        %v1140 = vsel %vm396, %v1126, 0.0
        %1141 = vadd.xlane.f32.xlu0 %v1140
        %v1142 = vpop.xlane.xlu0 %1141
        %v1143 = vsel %vm396, %v1127, 0.0
        %1144 = vadd.xlane.f32.xlu0 %v1143
        %v1145 = vpop.xlane.xlu0 %1144
        %v1146 = vsel %vm396, %v1128, 0.0
        %1147 = vadd.xlane.f32.xlu0 %v1146
        %v1148 = vpop.xlane.xlu0 %1147
        %v1149 = vsel %vm396, %v1129, 0.0
        %1150 = vadd.xlane.f32.xlu0 %v1149
        %v1151 = vpop.xlane.xlu0 %1150
        %v1152 = vsel %vm396, %v1130, 0.0
        %1153 = vadd.xlane.f32.xlu0 %v1152
        %v1154 = vpop.xlane.xlu0 %1153
        %v1163 = vlaneseq
        %v1164 = vand.u32 %v1163, 127
        %v1165 = vlaneseq
        %v1166 = vshrl.u32 %v1165, 7
        %v1167 = vsub.s32 %v1164, %v1166
        %v1168 = vrot.slane %v1133, %v1167
        %v1169 = vadd.s32 %v1164, 4294967288
        %v1170 = vlaneseq
        %v1171 = vshrl.u32 %v1170, 7
        %v1172 = vsub.s32 %v1169, %v1171
        %v1173 = vrot.slane %v1136, %v1172
        %vm1174 = vcmask 130112
        %v1175 = vsel %vm1174, %v1173, %v1168
        %v1176 = vlaneseq
        %v1177 = vshrl.u32 %v1176, 7
        %v1178 = vsub.s32 %v1164, %v1177
        %v1179 = vrot.slane %v1139, %v1178
        %v1180 = vlaneseq
        %v1181 = vshrl.u32 %v1180, 7
        %v1182 = vsub.s32 %v1169, %v1181
        %v1183 = vrot.slane %v1142, %v1182
        %v1184 = vsel %vm1174, %v1183, %v1179
        %v1185 = vlaneseq
        %v1186 = vshrl.u32 %v1185, 7
        %v1187 = vsub.s32 %v1164, %v1186
        %v1188 = vrot.slane %v1145, %v1187
        %v1189 = vlaneseq
        %v1190 = vshrl.u32 %v1189, 7
        %v1191 = vsub.s32 %v1169, %v1190
        %v1192 = vrot.slane %v1148, %v1191
        %v1193 = vsel %vm1174, %v1192, %v1188
        %v1194 = vlaneseq
        %v1195 = vshrl.u32 %v1194, 7
        %v1196 = vsub.s32 %v1164, %v1195
        %v1197 = vrot.slane %v1151, %v1196
        %v1198 = vlaneseq
        %v1199 = vshrl.u32 %v1198, 7
        %v1200 = vsub.s32 %v1169, %v1199
        %v1201 = vrot.slane %v1154, %v1200
        %v1202 = vsel %vm1174, %v1201, %v1197
        %vm1203 = vcmask 1041409
        %v1204 = vsel %vm1203, %v1184, %v1175
        %vm1205 = vcmask 1042434
        %v1206 = vsel %vm1205, %v1193, %v1204
        %vm1207 = vcmask 1043459
        %v1208 = vsel %vm1207, %v1202, %v1206
        %vm1210 = vcmask 125952
        %v1211 = vsel %vm1210, %v1208, 0.0
        %1212 = vadd.xlane.f32.xlu0 %v1211
        %v1213 = vpop.xlane.xlu0 %1212
        %v1214 = vsel %vm396, %v1115, 0.0
        %1215 = vadd.xlane.f32.xlu0 %v1214
        %v1216 = vpop.xlane.xlu0 %1215
        %v1217 = vsel %vm396, %v1116, 0.0
        %1218 = vadd.xlane.f32.xlu0 %v1217
        %v1219 = vpop.xlane.xlu0 %1218
        %v1220 = vsel %vm396, %v1117, 0.0
        %1221 = vadd.xlane.f32.xlu0 %v1220
        %v1222 = vpop.xlane.xlu0 %1221
        %v1223 = vsel %vm396, %v1118, 0.0
        %1224 = vadd.xlane.f32.xlu0 %v1223
        %v1225 = vpop.xlane.xlu0 %1224
        %v1226 = vsel %vm396, %v1119, 0.0
        %1227 = vadd.xlane.f32.xlu0 %v1226
        %v1228 = vpop.xlane.xlu0 %1227
        %v1229 = vsel %vm396, %v1120, 0.0
        %1230 = vadd.xlane.f32.xlu0 %v1229
        %v1231 = vpop.xlane.xlu0 %1230
        %v1232 = vsel %vm396, %v1121, 0.0
        %1233 = vadd.xlane.f32.xlu0 %v1232
        %v1234 = vpop.xlane.xlu0 %1233
        %v1235 = vsel %vm396, %v1122, 0.0
        %1236 = vadd.xlane.f32.xlu0 %v1235
        %v1237 = vpop.xlane.xlu0 %1236
        %v1246 = vlaneseq
        %v1247 = vshrl.u32 %v1246, 7
        %v1248 = vsub.s32 %v1164, %v1247
        %v1249 = vrot.slane %v1216, %v1248
        %v1250 = vlaneseq
        %v1251 = vshrl.u32 %v1250, 7
        %v1252 = vsub.s32 %v1169, %v1251
        %v1253 = vrot.slane %v1219, %v1252
        %v1254 = vsel %vm1174, %v1253, %v1249
        %v1255 = vlaneseq
        %v1256 = vshrl.u32 %v1255, 7
        %v1257 = vsub.s32 %v1164, %v1256
        %v1258 = vrot.slane %v1222, %v1257
        %v1259 = vlaneseq
        %v1260 = vshrl.u32 %v1259, 7
        %v1261 = vsub.s32 %v1169, %v1260
        %v1262 = vrot.slane %v1225, %v1261
        %v1263 = vsel %vm1174, %v1262, %v1258
        %v1264 = vlaneseq
        %v1265 = vshrl.u32 %v1264, 7
        %v1266 = vsub.s32 %v1164, %v1265
        %v1267 = vrot.slane %v1228, %v1266
        %v1268 = vlaneseq
        %v1269 = vshrl.u32 %v1268, 7
        %v1270 = vsub.s32 %v1169, %v1269
        %v1271 = vrot.slane %v1231, %v1270
        %v1272 = vsel %vm1174, %v1271, %v1267
        %v1273 = vlaneseq
        %v1274 = vshrl.u32 %v1273, 7
        %v1275 = vsub.s32 %v1164, %v1274
        %v1276 = vrot.slane %v1234, %v1275
        %v1277 = vlaneseq
        %v1278 = vshrl.u32 %v1277, 7
        %v1279 = vsub.s32 %v1169, %v1278
        %v1280 = vrot.slane %v1237, %v1279
        %v1281 = vsel %vm1174, %v1280, %v1276
        %v1282 = vsel %vm1203, %v1263, %v1254
        %v1283 = vsel %vm1205, %v1272, %v1282
        %v1284 = vsel %vm1207, %v1281, %v1283
        %v1286 = vsel %vm1210, %v1284, 0.0
        %1287 = vadd.xlane.f32.xlu0 %v1286
        %v1288 = vpop.xlane.xlu0 %1287
        %s1289 = smul.u32 %s31, 4
        %s1290 = scalar_lea.vmem %s4, %s1289
        %v1291 = vld [vmem:[%s1290] sm:$0xf]
        %v1292 = vadd.f32 %v1291, %v1213
        %vm1293 = vcmask 3072
        %1294 = vst.msk [vmem:[%s1290] sm:$0xf] %vm1293, %v1292
        %s1295 = scalar_lea.vmem %s5, %s1289
        %v1296 = vld [vmem:[%s1295] sm:$0xf]
        %v1297 = vadd.f32 %v1296, %v1288
        %1298 = vst.msk [vmem:[%s1295] sm:$0xf] %vm1293, %v1297
        // Predicated region
        $region57: #{tpu_custom_call.1} parent=35 // pred_check
          %p1299 = pneg %p157
        $region58: #{tpu_custom_call.1} parent=35 // pred_check_branch
          %1301 = sbr.rel (%p1299) target = $region60
        $region59: #{tpu_custom_call.1} parent=35 // pred_region
          _
        $region60: #{tpu_custom_call.1} parent=35 // pred_fallthru
          _
        // Predicated region
        $region61: #{tpu_custom_call.1} parent=35 // pred_check
          %p1302 = pneg %p178
        $region62: #{tpu_custom_call.1} parent=35 // pred_check_branch
          %1304 = sbr.rel (%p1302) target = $region64
        $region63: #{tpu_custom_call.1} parent=35 // pred_region
          _
        $region64: #{tpu_custom_call.1} parent=35 // pred_fallthru
          _
        // Predicated region
        $region65: #{tpu_custom_call.1} parent=35 // pred_check
          %p1305 = pneg %p157
        $region66: #{tpu_custom_call.1} parent=35 // pred_check_branch
          %1307 = sbr.rel (%p1305) target = $region68
        $region67: #{tpu_custom_call.1} parent=35 // pred_region
          _
        $region68: #{tpu_custom_call.1} parent=35 // pred_fallthru
          _
        // Predicated region
        $region69: #{tpu_custom_call.1} parent=35 // pred_check
          %p1308 = pneg %p178
        $region70: #{tpu_custom_call.1} parent=35 // pred_check_branch
          %1310 = sbr.rel (%p1308) target = $region72
        $region71: #{tpu_custom_call.1} parent=35 // pred_region
          _
        $region72: #{tpu_custom_call.1} parent=35 // pred_fallthru
          _
      $region36: #{tpu_custom_call.1} parent=5 // pred_fallthru
        _
      %p1311 = scmp.le.s32.totalorder 2, %s21
      // Predicated region
      $region73: #{tpu_custom_call.1} parent=5 // pred_check
        %p1312 = pneg %p1311
      $region74: #{tpu_custom_call.1} parent=5 // pred_check_branch
        %1314 = sbr.rel (%p1312) target = $region76
      $region75: #{tpu_custom_call.1} parent=5 // pred_region
        %s1315 = ssub.s32 %s21, 2
      $region76: #{tpu_custom_call.1} parent=5 // pred_fallthru
        _
    $region6: #{tpu_custom_call.1} parent=1 // loop_footer
      %s25 = sadd.s32 1, %s21
    $region7: #{tpu_custom_call.1} parent=1 // loop_footer_branch
      %20 = sbr.rel target = $region3
    $region8: #{tpu_custom_call.1} parent=1 // loop_exit
      _
    %1316 = vsyncpa [#allocation4], 1
    %s1317 = scalar_lea.sflag [#allocation4], 1
    %1318 = vsyncpa %s1317, 1
    %1319 = vsyncpa [#allocation6], 1
    %s1320 = scalar_lea.sflag [#allocation6], 1
    %1321 = vsyncpa %s1320, 1
    %1322 = vsyncpa [#allocation9], 1
    %s1323 = scalar_lea.sflag [#allocation9], 1
    %1324 = vsyncpa %s1323, 1

</llo_original>
